<compile_context>
chip_gen: v7x
topology: tpu7x:2x2x1
jax: 0.10.0
libtpu: 0.0.40
codegen_flags: <defaults>
</compile_context>

<pallas_src>
import functools

import jax
import jax.numpy as jnp
from jax import lax
from jax.experimental import pallas as pl
from jax.experimental.pallas import tpu as pltpu


def mha_kernel(x_ref, wq_ref, wk_ref, wv_ref, wp_ref, bp_ref, o_ref, *, T, H, hs):
    """One grid step = `Bt` batch elements, all heads + projection.

    x_ref  : (Bt*T, C)    flattened (batch, token) rows
    wq/wk/wv_ref : (C, H*hs)  per-head weights fused along the output (lane) dim
    wp_ref : (H*hs, C)    projection weight (pre-transposed)
    bp_ref : (1, C)       projection bias
    o_ref  : (Bt*T, C)    output rows
    """
    x = x_ref[...]                                   # (Bt*T, C) f32
    BtT, C = x.shape
    Bt = BtT // T
    scale = float(hs) ** -0.5                        # k.shape[-1] ** -0.5

    # ---- fused QKV: three wide MXU matmuls (all heads at once) -------------
    q = jnp.dot(x, wq_ref[...], preferred_element_type=jnp.float32) * scale
    k = jnp.dot(x, wk_ref[...], preferred_element_type=jnp.float32)
    v = jnp.dot(x, wv_ref[...], preferred_element_type=jnp.float32)

    # Leading-dim split only (second-minor dims stay multiples of the sublane
    # tile) -> layout-preserving, no data movement.
    q3 = q.reshape(Bt, T, H * hs)
    k3 = k.reshape(Bt, T, H * hs)
    v3 = v.reshape(Bt, T, H * hs)

    # Causal mask as a finite additive bias (built once, hoisted out of loop).
    rows = lax.broadcasted_iota(jnp.int32, (T, T), 0)
    cols = lax.broadcasted_iota(jnp.int32, (T, T), 1)
    mask_bias = jnp.where(cols <= rows,
                          jnp.float32(0.0),
                          jnp.float32(-1e30)).astype(jnp.float32)[None]   # (1,T,T)

    acc = jnp.zeros((BtT, C), jnp.float32)
    for h in range(H):                               # H is small & static -> unrolled
        lo = h * hs
        qh = q3[:, :, lo:lo + hs]                    # (Bt, T, hs)
        kh = k3[:, :, lo:lo + hs]
        vh = v3[:, :, lo:lo + hs]

        # Contract last dims directly (no transpose of k).
        s = jnp.einsum('btd,bsd->bts', qh, kh,
                       preferred_element_type=jnp.float32)                # (Bt,T,T)
        s = s + mask_bias

        # softmax over last dim (f32 throughout)
        s = s - jnp.max(s, axis=-1, keepdims=True)
        p = jnp.exp(s)
        p = p / jnp.sum(p, axis=-1, keepdims=True)
        # dropout(p) == identity in eval mode

        oh = jnp.einsum('bts,bsd->btd', p, vh,
                        preferred_element_type=jnp.float32)               # (Bt,T,hs)

        # Fold the output projection into the head loop (no concatenate).
        acc = acc + jnp.dot(oh.reshape(BtT, hs), wp_ref[lo:lo + hs, :],
                            preferred_element_type=jnp.float32)

    # dropout(out) == identity in eval mode
    o_ref[...] = acc + bp_ref[...]


def multi_head_attention(x, wq, wk, wv, wp_t, bp, *, batch_tile=None):
    """x: (B, T, C); wq/wk/wv: (H, C, hs); wp_t: (H*hs, C); bp: (C,)."""
    B, T, C = x.shape
    H, _, hs = wq.shape
    Bt = B if batch_tile is None else batch_tile
    assert B % Bt == 0

    # Fuse per-head weights along the output (lane) dim: (H, C, hs) -> (C, H*hs)
    wq_f = jnp.swapaxes(wq, 0, 1).reshape(C, H * hs)
    wk_f = jnp.swapaxes(wk, 0, 1).reshape(C, H * hs)
    wv_f = jnp.swapaxes(wv, 0, 1).reshape(C, H * hs)
    bp2 = bp.reshape(1, C)
    x_flat = x.reshape(B * T, C)                     # free reshape in HBM

    kernel = functools.partial(mha_kernel, T=T, H=H, hs=hs)

    out_flat = pl.pallas_call(
        kernel,
        out_shape=jax.ShapeDtypeStruct((B * T, C), jnp.float32),
        grid_spec=pltpu.PrefetchScalarGridSpec(
            num_scalar_prefetch=0,
            grid=(B // Bt,),
            in_specs=[
                pl.BlockSpec((Bt * T, C), lambda b: (b, 0)),      # x rows
                pl.BlockSpec((C, H * hs), lambda b: (0, 0)),      # Wq fused
                pl.BlockSpec((C, H * hs), lambda b: (0, 0)),      # Wk fused
                pl.BlockSpec((C, H * hs), lambda b: (0, 0)),      # Wv fused
                pl.BlockSpec((H * hs, C), lambda b: (0, 0)),      # Wp^T
                pl.BlockSpec((1, C), lambda b: (0, 0)),           # bias
            ],
            out_specs=pl.BlockSpec((Bt * T, C), lambda b: (b, 0)),
        ),
        compiler_params=pltpu.CompilerParams(
            dimension_semantics=("parallel",),
        ),
    )(x_flat, wq_f, wk_f, wv_f, wp_t, bp2)

    return out_flat.reshape(B, T, C)


def reference(x, wq, wk, wv, wp_t, bp):
    """Pure-JAX reference matching the PyTorch forward (eval mode)."""
    B, T, C = x.shape
    H, _, hs = wq.shape
    outs = []
    rows = jnp.arange(T)[:, None]
    cols = jnp.arange(T)[None, :]
    causal = cols <= rows
    for h in range(H):
        q = x @ wq[h]
        k = x @ wk[h]
        v = x @ wv[h]
        aff = (q @ jnp.swapaxes(k, -2, -1)) * (hs ** -0.5)
        aff = jnp.where(causal, aff, -jnp.inf)
        p = jax.nn.softmax(aff, axis=-1)
        outs.append(p @ v)
    cat = jnp.concatenate(outs, axis=-1)
    return cat @ wp_t + bp


if __name__ == "__main__":
    # Small, module-consistent shapes
    B, T, C = 2, 8, 32            # batch, tokens (== blockSize), embeddingDims
    H, hs = 4, 8                  # numHeads, headSize  (H * hs == C)

    key = jax.random.PRNGKey(0)
    kx, kq, kk, kv, kp, kb = jax.random.split(key, 6)

    x = jax.random.normal(kx, (B, T, C), dtype=jnp.float32)
    # nn.Linear(embeddingDims, headSize, bias=False): weight (hs, C); stored as W.T -> (C, hs)
    wq = 0.1 * jax.random.normal(kq, (H, C, hs), dtype=jnp.float32)
    wk = 0.1 * jax.random.normal(kk, (H, C, hs), dtype=jnp.float32)
    wv = 0.1 * jax.random.normal(kv, (H, C, hs), dtype=jnp.float32)
    # nn.Linear(H*hs, C): weight (C, H*hs); stored as W.T -> (H*hs, C), plus bias (C,)
    wp_t = 0.1 * jax.random.normal(kp, (H * hs, C), dtype=jnp.float32)
    bp = 0.1 * jax.random.normal(kb, (C,), dtype=jnp.float32)

    out = multi_head_attention(x, wq, wk, wv, wp_t, bp)
    out = jax.block_until_ready(out)

    ref = reference(x, wq, wk, wv, wp_t, bp)
    assert out.shape == (B, T, C)
    assert jnp.allclose(out, ref, atol=1e-4, rtol=1e-4), "mismatch vs reference"

    print("KERNEL_OK")
</pallas_src>

<mosaic_0001>
module attributes {stable_mosaic.version = 11 : i64} {
  func.func @mha_kernel(%arg0: i32, %arg1: memref<16x32xf32, #tpu.memory_space<vmem>>, %arg2: memref<32x32xf32, #tpu.memory_space<vmem>>, %arg3: memref<32x32xf32, #tpu.memory_space<vmem>>, %arg4: memref<32x32xf32, #tpu.memory_space<vmem>>, %arg5: memref<32x32xf32, #tpu.memory_space<vmem>>, %arg6: memref<1x32xf32, #tpu.memory_space<vmem>>, %arg7: memref<16x32xf32, #tpu.memory_space<vmem>>) attributes {dimension_semantics = [#tpu.dimension_semantics<parallel>], iteration_bounds = array<i64: 1>, scalar_prefetch = 0 : i64, scratch_operands = 0 : i64, tpu.core_type = #tpu.core_type<tc>, window_params = [{transform_indices = @transform_0, window_bounds = array<i64: 16, 32>}, {pipeline_mode = #tpu.pipeline_mode<synchronous>, transform_indices = @transform_1, window_bounds = array<i64: 32, 32>}, {pipeline_mode = #tpu.pipeline_mode<synchronous>, transform_indices = @transform_2, window_bounds = array<i64: 32, 32>}, {pipeline_mode = #tpu.pipeline_mode<synchronous>, transform_indices = @transform_3, window_bounds = array<i64: 32, 32>}, {pipeline_mode = #tpu.pipeline_mode<synchronous>, transform_indices = @transform_4, window_bounds = array<i64: 32, 32>}, {pipeline_mode = #tpu.pipeline_mode<synchronous>, transform_indices = @transform_5, window_bounds = array<i64: 1, 32>}, {transform_indices = @transform_6, window_bounds = array<i64: 16, 32>}]} {
    %c0 = arith.constant 0 : index
    %c0_0 = arith.constant 0 : index
    %0 = vector.load %arg1[%c0, %c0_0] : memref<16x32xf32, #tpu.memory_space<vmem>>, vector<16x32xf32>
    %c0_1 = arith.constant 0 : index
    %c0_2 = arith.constant 0 : index
    %1 = vector.load %arg2[%c0_1, %c0_2] : memref<32x32xf32, #tpu.memory_space<vmem>>, vector<32x32xf32>
    %cst = arith.constant dense<0.000000e+00> : vector<16x32xf32>
    %2 = tpu.matmul %0, %1, %cst {dimension_numbers = #tpu.dot_dimension_numbers<[1], [0], [0], [1], [0, 0, 1, 1], [], []>} : vector<16x32xf32>, vector<32x32xf32>, vector<16x32xf32> -> vector<16x32xf32>
    %cst_3 = arith.constant 0.353553385 : f32
    %3 = vector.broadcast %cst_3 : f32 to vector<16x32xf32>
    %4 = arith.mulf %2, %3 : vector<16x32xf32>
    %c0_4 = arith.constant 0 : index
    %c0_5 = arith.constant 0 : index
    %5 = vector.load %arg3[%c0_4, %c0_5] : memref<32x32xf32, #tpu.memory_space<vmem>>, vector<32x32xf32>
    %cst_6 = arith.constant dense<0.000000e+00> : vector<16x32xf32>
    %6 = tpu.matmul %0, %5, %cst_6 {dimension_numbers = #tpu.dot_dimension_numbers<[1], [0], [0], [1], [0, 0, 1, 1], [], []>} : vector<16x32xf32>, vector<32x32xf32>, vector<16x32xf32> -> vector<16x32xf32>
    %c0_7 = arith.constant 0 : index
    %c0_8 = arith.constant 0 : index
    %7 = vector.load %arg4[%c0_7, %c0_8] : memref<32x32xf32, #tpu.memory_space<vmem>>, vector<32x32xf32>
    %cst_9 = arith.constant dense<0.000000e+00> : vector<16x32xf32>
    %8 = tpu.matmul %0, %7, %cst_9 {dimension_numbers = #tpu.dot_dimension_numbers<[1], [0], [0], [1], [0, 0, 1, 1], [], []>} : vector<16x32xf32>, vector<32x32xf32>, vector<16x32xf32> -> vector<16x32xf32>
    %9 = vector.shape_cast %4 : vector<16x32xf32> to vector<2x8x32xf32>
    %10 = vector.shape_cast %6 : vector<16x32xf32> to vector<2x8x32xf32>
    %11 = vector.shape_cast %8 : vector<16x32xf32> to vector<2x8x32xf32>
    %12 = tpu.iota {dimensions = array<i32: 0>} : vector<8x8xi32>
    %13 = tpu.iota {dimensions = array<i32: 1>} : vector<8x8xi32>
    %14 = arith.cmpi sle, %13, %12 : vector<8x8xi32>
    %cst_10 = arith.constant 0.000000e+00 : f32
    %cst_11 = arith.constant -1.000000e+30 : f32
    %15 = vector.broadcast %cst_10 : f32 to vector<8x8xf32>
    %16 = vector.broadcast %cst_11 : f32 to vector<8x8xf32>
    %17 = arith.select %14, %15, %16 : vector<8x8xi1>, vector<8x8xf32>
    %18 = vector.shape_cast %17 : vector<8x8xf32> to vector<1x8x8xf32>
    %cst_12 = arith.constant 0.000000e+00 : f32
    %19 = vector.broadcast %cst_12 : f32 to vector<16x32xf32>
    %20 = vector.extract_strided_slice %9 {offsets = [0, 0, 0], sizes = [2, 8, 8], strides = [1, 1, 1]} : vector<2x8x32xf32> to vector<2x8x8xf32>
    %21 = vector.extract_strided_slice %10 {offsets = [0, 0, 0], sizes = [2, 8, 8], strides = [1, 1, 1]} : vector<2x8x32xf32> to vector<2x8x8xf32>
    %22 = vector.extract_strided_slice %11 {offsets = [0, 0, 0], sizes = [2, 8, 8], strides = [1, 1, 1]} : vector<2x8x32xf32> to vector<2x8x8xf32>
    "tpu.trace_start"() <{level = 10 : i32, message = "btd,bsd->bts"}> : () -> ()
    %cst_13 = arith.constant dense<0.000000e+00> : vector<2x8x8xf32>
    %23 = tpu.matmul %20, %21, %cst_13 {dimension_numbers = #tpu.dot_dimension_numbers<[2], [2], [1], [1], [0, 0, 0, 1, 1, 1], [0], [0]>} : vector<2x8x8xf32>, vector<2x8x8xf32>, vector<2x8x8xf32> -> vector<2x8x8xf32>
    "tpu.trace_stop"() : () -> ()
    %24 = vector.broadcast %18 : vector<1x8x8xf32> to vector<2x8x8xf32>
    %25 = arith.addf %23, %24 : vector<2x8x8xf32>
    %cst_14 = arith.constant dense<0xFF800000> : vector<2x8xf32>
    %26 = vector.multi_reduction <maximumf>, %25, %cst_14 [2] : vector<2x8x8xf32> to vector<2x8xf32>
    %27 = vector.shape_cast %26 : vector<2x8xf32> to vector<2x8x1xf32>
    %28 = vector.broadcast %27 : vector<2x8x1xf32> to vector<2x8x8xf32>
    %29 = arith.subf %25, %28 : vector<2x8x8xf32>
    %30 = math.exp %29 : vector<2x8x8xf32>
    %cst_15 = arith.constant dense<0.000000e+00> : vector<2x8xf32>
    %31 = vector.multi_reduction <add>, %30, %cst_15 [2] : vector<2x8x8xf32> to vector<2x8xf32>
    %32 = vector.shape_cast %31 : vector<2x8xf32> to vector<2x8x1xf32>
    %33 = vector.broadcast %32 : vector<2x8x1xf32> to vector<2x8x8xf32>
    %34 = arith.divf %30, %33 : vector<2x8x8xf32>
    "tpu.trace_start"() <{level = 10 : i32, message = "bts,bsd->btd"}> : () -> ()
    %cst_16 = arith.constant dense<0.000000e+00> : vector<2x8x8xf32>
    %35 = tpu.matmul %34, %22, %cst_16 {dimension_numbers = #tpu.dot_dimension_numbers<[2], [1], [1], [2], [0, 0, 0, 1, 1, 2], [0], [0]>} : vector<2x8x8xf32>, vector<2x8x8xf32>, vector<2x8x8xf32> -> vector<2x8x8xf32>
    "tpu.trace_stop"() : () -> ()
    %36 = vector.shape_cast %35 : vector<2x8x8xf32> to vector<16x8xf32>
    %c0_17 = arith.constant 0 : index
    %c0_18 = arith.constant 0 : index
    %37 = vector.load %arg5[%c0_17, %c0_18] : memref<32x32xf32, #tpu.memory_space<vmem>>, vector<8x32xf32>
    %cst_19 = arith.constant dense<0.000000e+00> : vector<16x32xf32>
    %38 = tpu.matmul %36, %37, %cst_19 {dimension_numbers = #tpu.dot_dimension_numbers<[1], [0], [0], [1], [0, 0, 1, 1], [], []>} : vector<16x8xf32>, vector<8x32xf32>, vector<16x32xf32> -> vector<16x32xf32>
    %39 = arith.addf %19, %38 : vector<16x32xf32>
    %40 = vector.extract_strided_slice %9 {offsets = [0, 0, 8], sizes = [2, 8, 8], strides = [1, 1, 1]} : vector<2x8x32xf32> to vector<2x8x8xf32>
    %41 = vector.extract_strided_slice %10 {offsets = [0, 0, 8], sizes = [2, 8, 8], strides = [1, 1, 1]} : vector<2x8x32xf32> to vector<2x8x8xf32>
    %42 = vector.extract_strided_slice %11 {offsets = [0, 0, 8], sizes = [2, 8, 8], strides = [1, 1, 1]} : vector<2x8x32xf32> to vector<2x8x8xf32>
    "tpu.trace_start"() <{level = 10 : i32, message = "btd,bsd->bts"}> : () -> ()
    %cst_20 = arith.constant dense<0.000000e+00> : vector<2x8x8xf32>
    %43 = tpu.matmul %40, %41, %cst_20 {dimension_numbers = #tpu.dot_dimension_numbers<[2], [2], [1], [1], [0, 0, 0, 1, 1, 1], [0], [0]>} : vector<2x8x8xf32>, vector<2x8x8xf32>, vector<2x8x8xf32> -> vector<2x8x8xf32>
    "tpu.trace_stop"() : () -> ()
    %44 = vector.broadcast %18 : vector<1x8x8xf32> to vector<2x8x8xf32>
    %45 = arith.addf %43, %44 : vector<2x8x8xf32>
    %cst_21 = arith.constant dense<0xFF800000> : vector<2x8xf32>
    %46 = vector.multi_reduction <maximumf>, %45, %cst_21 [2] : vector<2x8x8xf32> to vector<2x8xf32>
    %47 = vector.shape_cast %46 : vector<2x8xf32> to vector<2x8x1xf32>
    %48 = vector.broadcast %47 : vector<2x8x1xf32> to vector<2x8x8xf32>
    %49 = arith.subf %45, %48 : vector<2x8x8xf32>
    %50 = math.exp %49 : vector<2x8x8xf32>
    %cst_22 = arith.constant dense<0.000000e+00> : vector<2x8xf32>
    %51 = vector.multi_reduction <add>, %50, %cst_22 [2] : vector<2x8x8xf32> to vector<2x8xf32>
    %52 = vector.shape_cast %51 : vector<2x8xf32> to vector<2x8x1xf32>
    %53 = vector.broadcast %52 : vector<2x8x1xf32> to vector<2x8x8xf32>
    %54 = arith.divf %50, %53 : vector<2x8x8xf32>
    "tpu.trace_start"() <{level = 10 : i32, message = "bts,bsd->btd"}> : () -> ()
    %cst_23 = arith.constant dense<0.000000e+00> : vector<2x8x8xf32>
    %55 = tpu.matmul %54, %42, %cst_23 {dimension_numbers = #tpu.dot_dimension_numbers<[2], [1], [1], [2], [0, 0, 0, 1, 1, 2], [0], [0]>} : vector<2x8x8xf32>, vector<2x8x8xf32>, vector<2x8x8xf32> -> vector<2x8x8xf32>
    "tpu.trace_stop"() : () -> ()
    %56 = vector.shape_cast %55 : vector<2x8x8xf32> to vector<16x8xf32>
    %c8 = arith.constant 8 : index
    %c0_24 = arith.constant 0 : index
    %57 = vector.load %arg5[%c8, %c0_24] : memref<32x32xf32, #tpu.memory_space<vmem>>, vector<8x32xf32>
    %cst_25 = arith.constant dense<0.000000e+00> : vector<16x32xf32>
    %58 = tpu.matmul %56, %57, %cst_25 {dimension_numbers = #tpu.dot_dimension_numbers<[1], [0], [0], [1], [0, 0, 1, 1], [], []>} : vector<16x8xf32>, vector<8x32xf32>, vector<16x32xf32> -> vector<16x32xf32>
    %59 = arith.addf %39, %58 : vector<16x32xf32>
    %60 = vector.extract_strided_slice %9 {offsets = [0, 0, 16], sizes = [2, 8, 8], strides = [1, 1, 1]} : vector<2x8x32xf32> to vector<2x8x8xf32>
    %61 = vector.extract_strided_slice %10 {offsets = [0, 0, 16], sizes = [2, 8, 8], strides = [1, 1, 1]} : vector<2x8x32xf32> to vector<2x8x8xf32>
    %62 = vector.extract_strided_slice %11 {offsets = [0, 0, 16], sizes = [2, 8, 8], strides = [1, 1, 1]} : vector<2x8x32xf32> to vector<2x8x8xf32>
    "tpu.trace_start"() <{level = 10 : i32, message = "btd,bsd->bts"}> : () -> ()
    %cst_26 = arith.constant dense<0.000000e+00> : vector<2x8x8xf32>
    %63 = tpu.matmul %60, %61, %cst_26 {dimension_numbers = #tpu.dot_dimension_numbers<[2], [2], [1], [1], [0, 0, 0, 1, 1, 1], [0], [0]>} : vector<2x8x8xf32>, vector<2x8x8xf32>, vector<2x8x8xf32> -> vector<2x8x8xf32>
    "tpu.trace_stop"() : () -> ()
    %64 = vector.broadcast %18 : vector<1x8x8xf32> to vector<2x8x8xf32>
    %65 = arith.addf %63, %64 : vector<2x8x8xf32>
    %cst_27 = arith.constant dense<0xFF800000> : vector<2x8xf32>
    %66 = vector.multi_reduction <maximumf>, %65, %cst_27 [2] : vector<2x8x8xf32> to vector<2x8xf32>
    %67 = vector.shape_cast %66 : vector<2x8xf32> to vector<2x8x1xf32>
    %68 = vector.broadcast %67 : vector<2x8x1xf32> to vector<2x8x8xf32>
    %69 = arith.subf %65, %68 : vector<2x8x8xf32>
    %70 = math.exp %69 : vector<2x8x8xf32>
    %cst_28 = arith.constant dense<0.000000e+00> : vector<2x8xf32>
    %71 = vector.multi_reduction <add>, %70, %cst_28 [2] : vector<2x8x8xf32> to vector<2x8xf32>
    %72 = vector.shape_cast %71 : vector<2x8xf32> to vector<2x8x1xf32>
    %73 = vector.broadcast %72 : vector<2x8x1xf32> to vector<2x8x8xf32>
    %74 = arith.divf %70, %73 : vector<2x8x8xf32>
    "tpu.trace_start"() <{level = 10 : i32, message = "bts,bsd->btd"}> : () -> ()
    %cst_29 = arith.constant dense<0.000000e+00> : vector<2x8x8xf32>
    %75 = tpu.matmul %74, %62, %cst_29 {dimension_numbers = #tpu.dot_dimension_numbers<[2], [1], [1], [2], [0, 0, 0, 1, 1, 2], [0], [0]>} : vector<2x8x8xf32>, vector<2x8x8xf32>, vector<2x8x8xf32> -> vector<2x8x8xf32>
    "tpu.trace_stop"() : () -> ()
    %76 = vector.shape_cast %75 : vector<2x8x8xf32> to vector<16x8xf32>
    %c16 = arith.constant 16 : index
    %c0_30 = arith.constant 0 : index
    %77 = vector.load %arg5[%c16, %c0_30] : memref<32x32xf32, #tpu.memory_space<vmem>>, vector<8x32xf32>
    %cst_31 = arith.constant dense<0.000000e+00> : vector<16x32xf32>
    %78 = tpu.matmul %76, %77, %cst_31 {dimension_numbers = #tpu.dot_dimension_numbers<[1], [0], [0], [1], [0, 0, 1, 1], [], []>} : vector<16x8xf32>, vector<8x32xf32>, vector<16x32xf32> -> vector<16x32xf32>
    %79 = arith.addf %59, %78 : vector<16x32xf32>
    %80 = vector.extract_strided_slice %9 {offsets = [0, 0, 24], sizes = [2, 8, 8], strides = [1, 1, 1]} : vector<2x8x32xf32> to vector<2x8x8xf32>
    %81 = vector.extract_strided_slice %10 {offsets = [0, 0, 24], sizes = [2, 8, 8], strides = [1, 1, 1]} : vector<2x8x32xf32> to vector<2x8x8xf32>
    %82 = vector.extract_strided_slice %11 {offsets = [0, 0, 24], sizes = [2, 8, 8], strides = [1, 1, 1]} : vector<2x8x32xf32> to vector<2x8x8xf32>
    "tpu.trace_start"() <{level = 10 : i32, message = "btd,bsd->bts"}> : () -> ()
    %cst_32 = arith.constant dense<0.000000e+00> : vector<2x8x8xf32>
    %83 = tpu.matmul %80, %81, %cst_32 {dimension_numbers = #tpu.dot_dimension_numbers<[2], [2], [1], [1], [0, 0, 0, 1, 1, 1], [0], [0]>} : vector<2x8x8xf32>, vector<2x8x8xf32>, vector<2x8x8xf32> -> vector<2x8x8xf32>
    "tpu.trace_stop"() : () -> ()
    %84 = vector.broadcast %18 : vector<1x8x8xf32> to vector<2x8x8xf32>
    %85 = arith.addf %83, %84 : vector<2x8x8xf32>
    %cst_33 = arith.constant dense<0xFF800000> : vector<2x8xf32>
    %86 = vector.multi_reduction <maximumf>, %85, %cst_33 [2] : vector<2x8x8xf32> to vector<2x8xf32>
    %87 = vector.shape_cast %86 : vector<2x8xf32> to vector<2x8x1xf32>
    %88 = vector.broadcast %87 : vector<2x8x1xf32> to vector<2x8x8xf32>
    %89 = arith.subf %85, %88 : vector<2x8x8xf32>
    %90 = math.exp %89 : vector<2x8x8xf32>
    %cst_34 = arith.constant dense<0.000000e+00> : vector<2x8xf32>
    %91 = vector.multi_reduction <add>, %90, %cst_34 [2] : vector<2x8x8xf32> to vector<2x8xf32>
    %92 = vector.shape_cast %91 : vector<2x8xf32> to vector<2x8x1xf32>
    %93 = vector.broadcast %92 : vector<2x8x1xf32> to vector<2x8x8xf32>
    %94 = arith.divf %90, %93 : vector<2x8x8xf32>
    "tpu.trace_start"() <{level = 10 : i32, message = "bts,bsd->btd"}> : () -> ()
    %cst_35 = arith.constant dense<0.000000e+00> : vector<2x8x8xf32>
    %95 = tpu.matmul %94, %82, %cst_35 {dimension_numbers = #tpu.dot_dimension_numbers<[2], [1], [1], [2], [0, 0, 0, 1, 1, 2], [0], [0]>} : vector<2x8x8xf32>, vector<2x8x8xf32>, vector<2x8x8xf32> -> vector<2x8x8xf32>
    "tpu.trace_stop"() : () -> ()
    %96 = vector.shape_cast %95 : vector<2x8x8xf32> to vector<16x8xf32>
    %c24 = arith.constant 24 : index
    %c0_36 = arith.constant 0 : index
    %97 = vector.load %arg5[%c24, %c0_36] : memref<32x32xf32, #tpu.memory_space<vmem>>, vector<8x32xf32>
    %cst_37 = arith.constant dense<0.000000e+00> : vector<16x32xf32>
    %98 = tpu.matmul %96, %97, %cst_37 {dimension_numbers = #tpu.dot_dimension_numbers<[1], [0], [0], [1], [0, 0, 1, 1], [], []>} : vector<16x8xf32>, vector<8x32xf32>, vector<16x32xf32> -> vector<16x32xf32>
    %99 = arith.addf %79, %98 : vector<16x32xf32>
    %c0_38 = arith.constant 0 : index
    %c0_39 = arith.constant 0 : index
    %100 = vector.load %arg6[%c0_38, %c0_39] : memref<1x32xf32, #tpu.memory_space<vmem>>, vector<1x32xf32>
    %101 = vector.broadcast %100 : vector<1x32xf32> to vector<16x32xf32>
    %102 = arith.addf %99, %101 : vector<16x32xf32>
    %c0_40 = arith.constant 0 : index
    %c0_41 = arith.constant 0 : index
    %103 = vector.load %arg7[%c0_40, %c0_41] : memref<16x32xf32, #tpu.memory_space<vmem>>, vector<16x32xf32>
    tpu.vector_store %arg7[%c0_40, %c0_41], %102 {strides = array<i32>} : memref<16x32xf32, #tpu.memory_space<vmem>>, vector<16x32xf32>,
    return
  }
  func.func @transform_0(%arg0: i32) -> (i32, i32) {
    %c0_i32 = arith.constant 0 : i32
    %c0_i32_0 = arith.constant 0 : i32
    return %arg0, %c0_i32 : i32, i32
  }
  func.func @transform_1(%arg0: i32) -> (i32, i32) {
    %c0_i32 = arith.constant 0 : i32
    %c0_i32_0 = arith.constant 0 : i32
    %c0_i32_1 = arith.constant 0 : i32
    return %c0_i32, %c0_i32_0 : i32, i32
  }
  func.func @transform_2(%arg0: i32) -> (i32, i32) {
    %c0_i32 = arith.constant 0 : i32
    %c0_i32_0 = arith.constant 0 : i32
    %c0_i32_1 = arith.constant 0 : i32
    return %c0_i32, %c0_i32_0 : i32, i32
  }
  func.func @transform_3(%arg0: i32) -> (i32, i32) {
    %c0_i32 = arith.constant 0 : i32
    %c0_i32_0 = arith.constant 0 : i32
    %c0_i32_1 = arith.constant 0 : i32
    return %c0_i32, %c0_i32_0 : i32, i32
  }
  func.func @transform_4(%arg0: i32) -> (i32, i32) {
    %c0_i32 = arith.constant 0 : i32
    %c0_i32_0 = arith.constant 0 : i32
    %c0_i32_1 = arith.constant 0 : i32
    return %c0_i32, %c0_i32_0 : i32, i32
  }
  func.func @transform_5(%arg0: i32) -> (i32, i32) {
    %c0_i32 = arith.constant 0 : i32
    %c0_i32_0 = arith.constant 0 : i32
    %c0_i32_1 = arith.constant 0 : i32
    return %c0_i32, %c0_i32_0 : i32, i32
  }
  func.func @transform_6(%arg0: i32) -> (i32, i32) {
    %c0_i32 = arith.constant 0 : i32
    %c0_i32_0 = arith.constant 0 : i32
    return %arg0, %c0_i32 : i32, i32
  }
}

</mosaic_0001>

<llo_original>
// kernel: tpu_custom_call.1
$region0: #{tpu_custom_call.1}
  #allocation0 [shape = 'u32[]', space=smem, size = 0x4, offset = 0x4, fixed_abs, tag = 'smem constant byte address 0x4 - core index']
  #allocation1 [shape = 'u32[144,128]{1,0:T(1,128)}', space=vmem, size = 0x12000, scoped, tag = 'internal scratch']
  %s0 = inlined_call_operand.hbm [shape: f32[16,32], index: 0, kind: input, shape index: {}]
  %s1 = inlined_call_operand.hbm [shape: f32[32,32], index: 1, kind: input, shape index: {}]
  %s2 = inlined_call_operand.hbm [shape: f32[32,32], index: 2, kind: input, shape index: {}]
  %s3 = inlined_call_operand.hbm [shape: f32[32,32], index: 3, kind: input, shape index: {}]
  %s4 = inlined_call_operand.hbm [shape: f32[32,32], index: 4, kind: input, shape index: {}]
  %s5 = inlined_call_operand.vmem [shape: f32[1,32], index: 5, kind: input, shape index: {}]
  %s6 = inlined_call_operand.hbm [shape: f32[16,32], index: 6, kind: output, shape index: {}]
  %s7 = sld [smem:[#allocation0]]
  $region54: #{tpu_custom_call.1} parent=0
    _
  %s9 = ssub.s32 1, %s7
  %s10 = scalar_select 0, %s9, %s7
  $region1: #{tpu_custom_call.1} parent=0
    #allocation2 [shape = 'u8[8192]{0}', space=vmem, size = 0x2000, scoped, tag = 'input window, operand 0, single buffered']
    #allocation3 [shape = 's32[1]{0}', space=sflag, size = 0x4, scoped, tag = 'scoped memory for tpu_custom_call.1']
    #allocation4 [shape = 's32[1]{0}', space=sflag, size = 0x4, scoped, tag = 'scoped memory for tpu_custom_call.1']
    #allocation5 [shape = 'u8[16384]{0}', space=vmem, size = 0x4000, scoped, tag = 'input window, operand 1, single buffered']
    #allocation6 [shape = 's32[1]{0}', space=sflag, size = 0x4, scoped, tag = 'scoped memory for tpu_custom_call.1']
    #allocation7 [shape = 'u8[16384]{0}', space=vmem, size = 0x4000, scoped, tag = 'input window, operand 2, single buffered']
    #allocation8 [shape = 'u8[16384]{0}', space=vmem, size = 0x4000, scoped, tag = 'input window, operand 3, single buffered']
    #allocation9 [shape = 's32[1]{0}', space=sflag, size = 0x4, scoped, tag = 'scoped memory for tpu_custom_call.1']
    #allocation10 [shape = 'u8[16384]{0}', space=vmem, size = 0x4000, scoped, tag = 'input window, operand 4, single buffered']
    #allocation11 [shape = 'u8[8192]{0}', space=vmem, size = 0x2000, scoped, tag = 'output window, operand 0, single buffered']
    %11 = vsyncpa [#allocation3], 0
    %12 = vsyncpa [#allocation6], 0
    %13 = vsyncpa [#allocation9], 0
    %14 = vsyncpa [#allocation4], 0
    // Predicated region
    $region2: #{tpu_custom_call.1} parent=1 // pred_check
      _
    $region3: #{tpu_custom_call.1} parent=1 // pred_check_branch
      %16 = sbr.rel (0) target = $region5
    $region4: #{tpu_custom_call.1} parent=1 // pred_region
      %s18 = ssub.s32 256, 256
      %19 = vsyncadd [#allocation3], %s18
      %s20 = sshll.u32 [#allocation2], 4
      %s21 = int_to_ptr.vmem [resolvable:$true] %s20
      %26 = dma.hbm_to_vmem [thread:$0]  %s0, 256, %s21, [#allocation3], 128, 128, 8
    $region5: #{tpu_custom_call.1} parent=1 // pred_fallthru
      _
    // Predicated region
    $region6: #{tpu_custom_call.1} parent=1 // pred_check
      _
    $region7: #{tpu_custom_call.1} parent=1 // pred_check_branch
      %28 = sbr.rel (0) target = $region9
    $region8: #{tpu_custom_call.1} parent=1 // pred_region
      %s30 = ssub.s32 512, 512
      %31 = vsyncadd [#allocation6], %s30
      %s32 = sshll.u32 [#allocation5], 4
      %s33 = int_to_ptr.vmem [resolvable:$true] %s32
      %38 = dma.hbm_to_vmem [thread:$0]  %s1, 512, %s33, [#allocation6], 128, 128, 8
    $region9: #{tpu_custom_call.1} parent=1 // pred_fallthru
      _
    // Predicated region
    $region10: #{tpu_custom_call.1} parent=1 // pred_check
      _
    $region11: #{tpu_custom_call.1} parent=1 // pred_check_branch
      %40 = sbr.rel (0) target = $region13
    $region12: #{tpu_custom_call.1} parent=1 // pred_region
      %s42 = ssub.s32 512, 512
      %43 = vsyncadd [#allocation6], %s42
      %s44 = sshll.u32 [#allocation7], 4
      %s45 = int_to_ptr.vmem [resolvable:$true] %s44
      %50 = dma.hbm_to_vmem [thread:$0]  %s2, 512, %s45, [#allocation6], 128, 128, 8
    $region13: #{tpu_custom_call.1} parent=1 // pred_fallthru
      _
    // Predicated region
    $region14: #{tpu_custom_call.1} parent=1 // pred_check
      _
    $region15: #{tpu_custom_call.1} parent=1 // pred_check_branch
      %52 = sbr.rel (0) target = $region17
    $region16: #{tpu_custom_call.1} parent=1 // pred_region
      %s54 = ssub.s32 512, 512
      %55 = vsyncadd [#allocation9], %s54
      %s56 = sshll.u32 [#allocation8], 4
      %s57 = int_to_ptr.vmem [resolvable:$true] %s56
      %62 = dma.hbm_to_vmem [thread:$0]  %s3, 512, %s57, [#allocation9], 128, 128, 8
    $region17: #{tpu_custom_call.1} parent=1 // pred_fallthru
      _
    // Predicated region
    $region18: #{tpu_custom_call.1} parent=1 // pred_check
      _
    $region19: #{tpu_custom_call.1} parent=1 // pred_check_branch
      %64 = sbr.rel (0) target = $region21
    $region20: #{tpu_custom_call.1} parent=1 // pred_region
      %s66 = ssub.s32 512, 512
      %67 = vsyncadd [#allocation9], %s66
      %s68 = sshll.u32 [#allocation10], 4
      %s69 = int_to_ptr.vmem [resolvable:$true] %s68
      %74 = dma.hbm_to_vmem [thread:$0]  %s4, 512, %s69, [#allocation9], 128, 128, 8
    $region21: #{tpu_custom_call.1} parent=1 // pred_fallthru
      _
    // Predicated region
    $region22: #{tpu_custom_call.1} parent=1 // pred_check
      _
    $region23: #{tpu_custom_call.1} parent=1 // pred_check_branch
      %76 = sbr.rel (0) target = $region25
    $region24: #{tpu_custom_call.1} parent=1 // pred_region
      _
    $region25: #{tpu_custom_call.1} parent=1 // pred_fallthru
      _
    // Predicated region
    $region26: #{tpu_custom_call.1} parent=1 // pred_check
      _
    $region27: #{tpu_custom_call.1} parent=1 // pred_check_branch
      %78 = sbr.rel (0) target = $region29
    $region28: #{tpu_custom_call.1} parent=1 // pred_region
      %79 = dma.done [#allocation3], 256
    $region29: #{tpu_custom_call.1} parent=1 // pred_fallthru
      _
    // Predicated region
    $region30: #{tpu_custom_call.1} parent=1 // pred_check
      _
    $region31: #{tpu_custom_call.1} parent=1 // pred_check_branch
      %81 = sbr.rel (0) target = $region33
    $region32: #{tpu_custom_call.1} parent=1 // pred_region
      %82 = dma.done [#allocation6], 512
    $region33: #{tpu_custom_call.1} parent=1 // pred_fallthru
      _
    // Predicated region
    $region34: #{tpu_custom_call.1} parent=1 // pred_check
      _
    $region35: #{tpu_custom_call.1} parent=1 // pred_check_branch
      %84 = sbr.rel (0) target = $region37
    $region36: #{tpu_custom_call.1} parent=1 // pred_region
      %85 = dma.done [#allocation6], 512
    $region37: #{tpu_custom_call.1} parent=1 // pred_fallthru
      _
    // Predicated region
    $region38: #{tpu_custom_call.1} parent=1 // pred_check
      _
    $region39: #{tpu_custom_call.1} parent=1 // pred_check_branch
      %87 = sbr.rel (0) target = $region41
    $region40: #{tpu_custom_call.1} parent=1 // pred_region
      %88 = dma.done [#allocation9], 512
    $region41: #{tpu_custom_call.1} parent=1 // pred_fallthru
      _
    // Predicated region
    $region42: #{tpu_custom_call.1} parent=1 // pred_check
      _
    $region43: #{tpu_custom_call.1} parent=1 // pred_check_branch
      %90 = sbr.rel (0) target = $region45
    $region44: #{tpu_custom_call.1} parent=1 // pred_region
      %91 = dma.done [#allocation9], 512
    $region45: #{tpu_custom_call.1} parent=1 // pred_fallthru
      _
    %v92 = vld [vmem:[#allocation2] sm:$0xff]
    %v93 = vld [vmem:[#allocation2 + $0x8] sm:$0xff]
    %v94 = vld [vmem:[#allocation5] sm:$0xff]
    %v95 = vld [vmem:[#allocation5 + $0x8] sm:$0xff]
    %v96 = vld [vmem:[#allocation5 + $0x10] sm:$0xff]
    %v97 = vld [vmem:[#allocation5 + $0x18] sm:$0xff]
    %vm98 = vcmask 261120
    %v100 = vsel %vm98, %v92, 0
    %v103 = vsel %vm98, %v93, 0
    %105 = vmatprep.subr.mxu0 0.0
    %106 = vmatpush1.msra.mxu0 %v94
    %107 = vmatprep.subr.mxu0 0.0
    %108 = vmatpush1.msra.mxu0 %v95
    %109 = vmatprep.subr.mxu0 0.0
    %110 = vmatpush1.msra.mxu0 %v96
    %111 = vmatprep.subr.mxu0 0.0
    %112 = vmatpush1.msra.mxu0 %v97
    %113 = vmatprep.subr.mxu0 0.0
    %114 = vmatpush1.msra.mxu0 0.0
    %115 = vmatprep.subr.mxu0 0.0
    %116 = vmatpush1.msra.mxu0 0.0
    %117 = vmatprep.subr.mxu0 0.0
    %118 = vmatpush1.msra.mxu0 0.0
    %119 = vmatprep.subr.mxu0 0.0
    %120 = vmatpush1.msra.mxu0 0.0
    %121 = vmatprep.subr.mxu0 0.0
    %122 = vmatpush1.msra.mxu0 0.0
    %123 = vmatprep.subr.mxu0 0.0
    %124 = vmatpush1.msra.mxu0 0.0
    %125 = vmatprep.subr.mxu0 0.0
    %126 = vmatpush1.msra.mxu0 0.0
    %127 = vmatprep.subr.mxu0 0.0
    %128 = vmatpush1.msra.mxu0 0.0
    %129 = vmatprep.subr.mxu0 0.0
    %130 = vmatpush1.msra.mxu0 0.0
    %131 = vmatprep.subr.mxu0 0.0
    %132 = vmatpush1.msra.mxu0 0.0
    %133 = vmatprep.subr.mxu0 0.0
    %134 = vmatpush1.msra.mxu0 0.0
    %135 = vmatprep.subr.mxu0 0.0
    %136 = vmatpush1.msra.mxu0 0.0
    %137 = vmatprep.subr.mxu0 0.0
    %138 = vmatpush1.msra.mxu0 0.0
    %139 = vmatprep.subr.mxu0 0.0
    %140 = vmatpush1.msra.mxu0 0.0
    %141 = vmatprep.subr.mxu0 0.0
    %142 = vmatpush1.msra.mxu0 0.0
    %143 = vmatprep.subr.mxu0 0.0
    %144 = vmatpush1.msra.mxu0 0.0
    %145 = vmatprep.subr.mxu0 0.0
    %146 = vmatpush1.msra.mxu0 0.0
    %147 = vmatprep.subr.mxu0 0.0
    %148 = vmatpush1.msra.mxu0 0.0
    %149 = vmatprep.subr.mxu0 0.0
    %150 = vmatpush1.msra.mxu0 0.0
    %151 = vmatprep.subr.mxu0 0.0
    %152 = vmatpush1.msra.mxu0 0.0
    %153 = vmatprep.subr.mxu0 0.0
    %154 = vmatpush1.msra.mxu0 0.0
    %155 = vmatprep.subr.mxu0 0.0
    %156 = vmatpush1.msra.mxu0 0.0
    %157 = vmatprep.subr.mxu0 0.0
    %158 = vmatpush1.msra.mxu0 0.0
    %159 = vmatprep.subr.mxu0 0.0
    %160 = vmatpush1.msra.mxu0 0.0
    %161 = vmatprep.subr.mxu0 0.0
    %162 = vmatpush1.msra.mxu0 0.0
    %163 = vmatprep.subr.mxu0 0.0
    %164 = vmatpush1.msra.mxu0 0.0
    %165 = vmatprep.subr.mxu0 0.0
    %166 = vmatpush1.msra.mxu0 0.0
    %167 = vmatprep.subr.mxu0 0.0
    %168 = vmatpush1.msra.mxu0 0.0
    %169 = vmatprep.mubr.f32.mxu0 0.0
    %170 = vmatmul.mubr.f32.gmra.mrb[0].mxu0 %v100
    %v171 = vpop.f32.mrb[0].mxu0
    %v172 = vadd.f32 0.0, %v171
    %v173 = vpop.f32.mrb[0].mxu0
    %174 = vmatprep.mubr.f32.mxu0 0.0
    %175 = vmatmul.mubr.f32.gmra.mrb[0].mxu0 %v103
    %v176 = vpop.f32.mrb[0].mxu0
    %v177 = vadd.f32 0.0, %v176
    %v178 = vpop.f32.mrb[0].mxu0
    %179 = vdwg.mxu0
    %v180 = vmul.f32 %v172, 0.35355338
    %v181 = vmul.f32 %v177, 0.35355338
    %v182 = vld [vmem:[#allocation7] sm:$0xff]
    %v183 = vld [vmem:[#allocation7 + $0x8] sm:$0xff]
    %v184 = vld [vmem:[#allocation7 + $0x10] sm:$0xff]
    %v185 = vld [vmem:[#allocation7 + $0x18] sm:$0xff]
    %186 = vmatprep.subr.mxu0 0.0
    %187 = vmatpush1.msra.mxu0 %v182
    %188 = vmatprep.subr.mxu0 0.0
    %189 = vmatpush1.msra.mxu0 %v183
    %190 = vmatprep.subr.mxu0 0.0
    %191 = vmatpush1.msra.mxu0 %v184
    %192 = vmatprep.subr.mxu0 0.0
    %193 = vmatpush1.msra.mxu0 %v185
    %194 = vmatprep.subr.mxu0 0.0
    %195 = vmatpush1.msra.mxu0 0.0
    %196 = vmatprep.subr.mxu0 0.0
    %197 = vmatpush1.msra.mxu0 0.0
    %198 = vmatprep.subr.mxu0 0.0
    %199 = vmatpush1.msra.mxu0 0.0
    %200 = vmatprep.subr.mxu0 0.0
    %201 = vmatpush1.msra.mxu0 0.0
    %202 = vmatprep.subr.mxu0 0.0
    %203 = vmatpush1.msra.mxu0 0.0
    %204 = vmatprep.subr.mxu0 0.0
    %205 = vmatpush1.msra.mxu0 0.0
    %206 = vmatprep.subr.mxu0 0.0
    %207 = vmatpush1.msra.mxu0 0.0
    %208 = vmatprep.subr.mxu0 0.0
    %209 = vmatpush1.msra.mxu0 0.0
    %210 = vmatprep.subr.mxu0 0.0
    %211 = vmatpush1.msra.mxu0 0.0
    %212 = vmatprep.subr.mxu0 0.0
    %213 = vmatpush1.msra.mxu0 0.0
    %214 = vmatprep.subr.mxu0 0.0
    %215 = vmatpush1.msra.mxu0 0.0
    %216 = vmatprep.subr.mxu0 0.0
    %217 = vmatpush1.msra.mxu0 0.0
    %218 = vmatprep.subr.mxu0 0.0
    %219 = vmatpush1.msra.mxu0 0.0
    %220 = vmatprep.subr.mxu0 0.0
    %221 = vmatpush1.msra.mxu0 0.0
    %222 = vmatprep.subr.mxu0 0.0
    %223 = vmatpush1.msra.mxu0 0.0
    %224 = vmatprep.subr.mxu0 0.0
    %225 = vmatpush1.msra.mxu0 0.0
    %226 = vmatprep.subr.mxu0 0.0
    %227 = vmatpush1.msra.mxu0 0.0
    %228 = vmatprep.subr.mxu0 0.0
    %229 = vmatpush1.msra.mxu0 0.0
    %230 = vmatprep.subr.mxu0 0.0
    %231 = vmatpush1.msra.mxu0 0.0
    %232 = vmatprep.subr.mxu0 0.0
    %233 = vmatpush1.msra.mxu0 0.0
    %234 = vmatprep.subr.mxu0 0.0
    %235 = vmatpush1.msra.mxu0 0.0
    %236 = vmatprep.subr.mxu0 0.0
    %237 = vmatpush1.msra.mxu0 0.0
    %238 = vmatprep.subr.mxu0 0.0
    %239 = vmatpush1.msra.mxu0 0.0
    %240 = vmatprep.subr.mxu0 0.0
    %241 = vmatpush1.msra.mxu0 0.0
    %242 = vmatprep.subr.mxu0 0.0
    %243 = vmatpush1.msra.mxu0 0.0
    %244 = vmatprep.subr.mxu0 0.0
    %245 = vmatpush1.msra.mxu0 0.0
    %246 = vmatprep.subr.mxu0 0.0
    %247 = vmatpush1.msra.mxu0 0.0
    %248 = vmatprep.subr.mxu0 0.0
    %249 = vmatpush1.msra.mxu0 0.0
    %250 = vmatprep.mubr.f32.mxu0 0.0
    %251 = vmatmul.mubr.f32.gmra.mrb[0].mxu0 %v100
    %v252 = vpop.f32.mrb[0].mxu0
    %v253 = vadd.f32 0.0, %v252
    %v254 = vpop.f32.mrb[0].mxu0
    %255 = vmatprep.mubr.f32.mxu0 0.0
    %256 = vmatmul.mubr.f32.gmra.mrb[0].mxu0 %v103
    %v257 = vpop.f32.mrb[0].mxu0
    %v258 = vadd.f32 0.0, %v257
    %v259 = vpop.f32.mrb[0].mxu0
    %260 = vdwg.mxu0
    %v261 = vld [vmem:[#allocation8] sm:$0xff]
    %v262 = vld [vmem:[#allocation8 + $0x8] sm:$0xff]
    %v263 = vld [vmem:[#allocation8 + $0x10] sm:$0xff]
    %v264 = vld [vmem:[#allocation8 + $0x18] sm:$0xff]
    %265 = vmatprep.subr.mxu0 0.0
    %266 = vmatpush1.msra.mxu0 %v261
    %267 = vmatprep.subr.mxu0 0.0
    %268 = vmatpush1.msra.mxu0 %v262
    %269 = vmatprep.subr.mxu0 0.0
    %270 = vmatpush1.msra.mxu0 %v263
    %271 = vmatprep.subr.mxu0 0.0
    %272 = vmatpush1.msra.mxu0 %v264
    %273 = vmatprep.subr.mxu0 0.0
    %274 = vmatpush1.msra.mxu0 0.0
    %275 = vmatprep.subr.mxu0 0.0
    %276 = vmatpush1.msra.mxu0 0.0
    %277 = vmatprep.subr.mxu0 0.0
    %278 = vmatpush1.msra.mxu0 0.0
    %279 = vmatprep.subr.mxu0 0.0
    %280 = vmatpush1.msra.mxu0 0.0
    %281 = vmatprep.subr.mxu0 0.0
    %282 = vmatpush1.msra.mxu0 0.0
    %283 = vmatprep.subr.mxu0 0.0
    %284 = vmatpush1.msra.mxu0 0.0
    %285 = vmatprep.subr.mxu0 0.0
    %286 = vmatpush1.msra.mxu0 0.0
    %287 = vmatprep.subr.mxu0 0.0
    %288 = vmatpush1.msra.mxu0 0.0
    %289 = vmatprep.subr.mxu0 0.0
    %290 = vmatpush1.msra.mxu0 0.0
    %291 = vmatprep.subr.mxu0 0.0
    %292 = vmatpush1.msra.mxu0 0.0
    %293 = vmatprep.subr.mxu0 0.0
    %294 = vmatpush1.msra.mxu0 0.0
    %295 = vmatprep.subr.mxu0 0.0
    %296 = vmatpush1.msra.mxu0 0.0
    %297 = vmatprep.subr.mxu0 0.0
    %298 = vmatpush1.msra.mxu0 0.0
    %299 = vmatprep.subr.mxu0 0.0
    %300 = vmatpush1.msra.mxu0 0.0
    %301 = vmatprep.subr.mxu0 0.0
    %302 = vmatpush1.msra.mxu0 0.0
    %303 = vmatprep.subr.mxu0 0.0
    %304 = vmatpush1.msra.mxu0 0.0
    %305 = vmatprep.subr.mxu0 0.0
    %306 = vmatpush1.msra.mxu0 0.0
    %307 = vmatprep.subr.mxu0 0.0
    %308 = vmatpush1.msra.mxu0 0.0
    %309 = vmatprep.subr.mxu0 0.0
    %310 = vmatpush1.msra.mxu0 0.0
    %311 = vmatprep.subr.mxu0 0.0
    %312 = vmatpush1.msra.mxu0 0.0
    %313 = vmatprep.subr.mxu0 0.0
    %314 = vmatpush1.msra.mxu0 0.0
    %315 = vmatprep.subr.mxu0 0.0
    %316 = vmatpush1.msra.mxu0 0.0
    %317 = vmatprep.subr.mxu0 0.0
    %318 = vmatpush1.msra.mxu0 0.0
    %319 = vmatprep.subr.mxu0 0.0
    %320 = vmatpush1.msra.mxu0 0.0
    %321 = vmatprep.subr.mxu0 0.0
    %322 = vmatpush1.msra.mxu0 0.0
    %323 = vmatprep.subr.mxu0 0.0
    %324 = vmatpush1.msra.mxu0 0.0
    %325 = vmatprep.subr.mxu0 0.0
    %326 = vmatpush1.msra.mxu0 0.0
    %327 = vmatprep.subr.mxu0 0.0
    %328 = vmatpush1.msra.mxu0 0.0
    %329 = vmatprep.mubr.f32.mxu0 0.0
    %330 = vmatmul.mubr.f32.gmra.mrb[0].mxu0 %v100
    %v331 = vpop.f32.mrb[0].mxu0
    %v332 = vadd.f32 0.0, %v331
    %v333 = vpop.f32.mrb[0].mxu0
    %334 = vmatprep.mubr.f32.mxu0 0.0
    %335 = vmatmul.mubr.f32.gmra.mrb[0].mxu0 %v103
    %v336 = vpop.f32.mrb[0].mxu0
    %v337 = vadd.f32 0.0, %v336
    %v338 = vpop.f32.mrb[0].mxu0
    %339 = vdwg.mxu0
    %v340 = vlaneseq
    %v341 = vshrl.u32 %v340, 7
    %v342 = vlaneseq
    %v343 = vand.u32 %v342, 127
    %vm344 = vcmp.le.s32.totalorder %v343, %v341
    %v345 = vsel %vm344, 0.0, -1e+30
    %vm346 = vcmask 64512
    %v348 = vsel %vm346, %v180, 0
    %v351 = vsel %vm346, %v253, 0
    %353 = vmatprep.subr.mxu0 0.0
    %354 = vmatpush1.xpose.msra.mxu0 %v351
    %355 = vmatprep.subr.mxu0 0.0
    %356 = vmatpush1.xpose.msra.mxu0 0.0
    %357 = vmatprep.subr.mxu0 0.0
    %358 = vmatpush1.xpose.msra.mxu0 0.0
    %359 = vmatprep.subr.mxu0 0.0
    %360 = vmatpush1.xpose.msra.mxu0 0.0
    %361 = vmatprep.subr.mxu0 0.0
    %362 = vmatpush1.xpose.msra.mxu0 0.0
    %363 = vmatprep.subr.mxu0 0.0
    %364 = vmatpush1.xpose.msra.mxu0 0.0
    %365 = vmatprep.subr.mxu0 0.0
    %366 = vmatpush1.xpose.msra.mxu0 0.0
    %367 = vmatprep.subr.mxu0 0.0
    %368 = vmatpush1.xpose.msra.mxu0 0.0
    %369 = vmatprep.subr.mxu0 0.0
    %370 = vmatpush1.xpose.msra.mxu0 0.0
    %371 = vmatprep.subr.mxu0 0.0
    %372 = vmatpush1.xpose.msra.mxu0 0.0
    %373 = vmatprep.subr.mxu0 0.0
    %374 = vmatpush1.xpose.msra.mxu0 0.0
    %375 = vmatprep.subr.mxu0 0.0
    %376 = vmatpush1.xpose.msra.mxu0 0.0
    %377 = vmatprep.subr.mxu0 0.0
    %378 = vmatpush1.xpose.msra.mxu0 0.0
    %379 = vmatprep.subr.mxu0 0.0
    %380 = vmatpush1.xpose.msra.mxu0 0.0
    %381 = vmatprep.subr.mxu0 0.0
    %382 = vmatpush1.xpose.msra.mxu0 0.0
    %383 = vmatprep.subr.mxu0 0.0
    %384 = vmatpush1.xpose.msra.mxu0 0.0
    %385 = vmatprep.subr.mxu0 0.0
    %386 = vmatpush1.xpose.msra.mxu0 0.0
    %387 = vmatprep.subr.mxu0 0.0
    %388 = vmatpush1.xpose.msra.mxu0 0.0
    %389 = vmatprep.subr.mxu0 0.0
    %390 = vmatpush1.xpose.msra.mxu0 0.0
    %391 = vmatprep.subr.mxu0 0.0
    %392 = vmatpush1.xpose.msra.mxu0 0.0
    %393 = vmatprep.subr.mxu0 0.0
    %394 = vmatpush1.xpose.msra.mxu0 0.0
    %395 = vmatprep.subr.mxu0 0.0
    %396 = vmatpush1.xpose.msra.mxu0 0.0
    %397 = vmatprep.subr.mxu0 0.0
    %398 = vmatpush1.xpose.msra.mxu0 0.0
    %399 = vmatprep.subr.mxu0 0.0
    %400 = vmatpush1.xpose.msra.mxu0 0.0
    %401 = vmatprep.subr.mxu0 0.0
    %402 = vmatpush1.xpose.msra.mxu0 0.0
    %403 = vmatprep.subr.mxu0 0.0
    %404 = vmatpush1.xpose.msra.mxu0 0.0
    %405 = vmatprep.subr.mxu0 0.0
    %406 = vmatpush1.xpose.msra.mxu0 0.0
    %407 = vmatprep.subr.mxu0 0.0
    %408 = vmatpush1.xpose.msra.mxu0 0.0
    %409 = vmatprep.subr.mxu0 0.0
    %410 = vmatpush1.xpose.msra.mxu0 0.0
    %411 = vmatprep.subr.mxu0 0.0
    %412 = vmatpush1.xpose.msra.mxu0 0.0
    %413 = vmatprep.subr.mxu0 0.0
    %414 = vmatpush1.xpose.msra.mxu0 0.0
    %415 = vmatprep.subr.mxu0 0.0
    %416 = vmatpush1.xpose.msra.mxu0 0.0
    %417 = vmatprep.mubr.f32.mxu0 0.0
    %418 = vmatmul.mubr.f32.gmra.mrb[0].mxu0 %v348
    %v419 = vpop.f32.mrb[0].mxu0
    %v420 = vadd.f32 %v345, %v419
    %v421 = vpop.f32.mrb[0].mxu0
    %422 = vdwg.mxu0
    %v424 = vsel %vm346, %v181, 0
    %v427 = vsel %vm346, %v258, 0
    %429 = vmatprep.subr.mxu0 0.0
    %430 = vmatpush1.xpose.msra.mxu0 %v427
    %431 = vmatprep.subr.mxu0 0.0
    %432 = vmatpush1.xpose.msra.mxu0 0.0
    %433 = vmatprep.subr.mxu0 0.0
    %434 = vmatpush1.xpose.msra.mxu0 0.0
    %435 = vmatprep.subr.mxu0 0.0
    %436 = vmatpush1.xpose.msra.mxu0 0.0
    %437 = vmatprep.subr.mxu0 0.0
    %438 = vmatpush1.xpose.msra.mxu0 0.0
    %439 = vmatprep.subr.mxu0 0.0
    %440 = vmatpush1.xpose.msra.mxu0 0.0
    %441 = vmatprep.subr.mxu0 0.0
    %442 = vmatpush1.xpose.msra.mxu0 0.0
    %443 = vmatprep.subr.mxu0 0.0
    %444 = vmatpush1.xpose.msra.mxu0 0.0
    %445 = vmatprep.subr.mxu0 0.0
    %446 = vmatpush1.xpose.msra.mxu0 0.0
    %447 = vmatprep.subr.mxu0 0.0
    %448 = vmatpush1.xpose.msra.mxu0 0.0
    %449 = vmatprep.subr.mxu0 0.0
    %450 = vmatpush1.xpose.msra.mxu0 0.0
    %451 = vmatprep.subr.mxu0 0.0
    %452 = vmatpush1.xpose.msra.mxu0 0.0
    %453 = vmatprep.subr.mxu0 0.0
    %454 = vmatpush1.xpose.msra.mxu0 0.0
    %455 = vmatprep.subr.mxu0 0.0
    %456 = vmatpush1.xpose.msra.mxu0 0.0
    %457 = vmatprep.subr.mxu0 0.0
    %458 = vmatpush1.xpose.msra.mxu0 0.0
    %459 = vmatprep.subr.mxu0 0.0
    %460 = vmatpush1.xpose.msra.mxu0 0.0
    %461 = vmatprep.subr.mxu0 0.0
    %462 = vmatpush1.xpose.msra.mxu0 0.0
    %463 = vmatprep.subr.mxu0 0.0
    %464 = vmatpush1.xpose.msra.mxu0 0.0
    %465 = vmatprep.subr.mxu0 0.0
    %466 = vmatpush1.xpose.msra.mxu0 0.0
    %467 = vmatprep.subr.mxu0 0.0
    %468 = vmatpush1.xpose.msra.mxu0 0.0
    %469 = vmatprep.subr.mxu0 0.0
    %470 = vmatpush1.xpose.msra.mxu0 0.0
    %471 = vmatprep.subr.mxu0 0.0
    %472 = vmatpush1.xpose.msra.mxu0 0.0
    %473 = vmatprep.subr.mxu0 0.0
    %474 = vmatpush1.xpose.msra.mxu0 0.0
    %475 = vmatprep.subr.mxu0 0.0
    %476 = vmatpush1.xpose.msra.mxu0 0.0
    %477 = vmatprep.subr.mxu0 0.0
    %478 = vmatpush1.xpose.msra.mxu0 0.0
    %479 = vmatprep.subr.mxu0 0.0
    %480 = vmatpush1.xpose.msra.mxu0 0.0
    %481 = vmatprep.subr.mxu0 0.0
    %482 = vmatpush1.xpose.msra.mxu0 0.0
    %483 = vmatprep.subr.mxu0 0.0
    %484 = vmatpush1.xpose.msra.mxu0 0.0
    %485 = vmatprep.subr.mxu0 0.0
    %486 = vmatpush1.xpose.msra.mxu0 0.0
    %487 = vmatprep.subr.mxu0 0.0
    %488 = vmatpush1.xpose.msra.mxu0 0.0
    %489 = vmatprep.subr.mxu0 0.0
    %490 = vmatpush1.xpose.msra.mxu0 0.0
    %491 = vmatprep.subr.mxu0 0.0
    %492 = vmatpush1.xpose.msra.mxu0 0.0
    %493 = vmatprep.mubr.f32.mxu0 0.0
    %494 = vmatmul.mubr.f32.gmra.mrb[0].mxu0 %v424
    %v495 = vpop.f32.mrb[0].mxu0
    %v496 = vadd.f32 %v345, %v495
    %v497 = vpop.f32.mrb[0].mxu0
    %498 = vdwg.mxu0
    %v499 = vsel %vm346, %v420, -inf
    %500 = vmax.xlane.f32.xlu0 %v499
    %v501 = vpop.xlane.xlu0 %500
    %v502 = vsel %vm346, %v496, -inf
    %503 = vmax.xlane.f32.xlu0 %v502
    %v504 = vpop.xlane.xlu0 %503
    %v505 = vsub.f32 %v420, %v501
    %v506 = vsub.f32 %v496, %v504
    %v507 = vmul.f32 %v505, 1.442695
    %v508 = vpow.pop %v507
    %v509 = vmul.f32 %v506, 1.442695
    %v510 = vpow.pop %v509
    %v511 = vsel %vm346, %v508, 0.0
    %512 = vadd.xlane.f32.xlu0 %v511
    %v513 = vpop.xlane.xlu0 %512
    %v514 = vsel %vm346, %v510, 0.0
    %515 = vadd.xlane.f32.xlu0 %v514
    %v516 = vpop.xlane.xlu0 %515
    %v517 = vrcp.pop %v513
    %v518 = vmul.f32 %v508, %v517
    %v519 = vrcp.pop %v516
    %v520 = vmul.f32 %v510, %v519
    %v522 = vsel %vm346, %v518, 0
    %524 = vmatprep.subr.mxu0 0.0
    %525 = vmatpush1.msra.mxu0 %v332
    %526 = vmatprep.subr.mxu0 0.0
    %527 = vmatpush1.msra.mxu0 0.0
    %528 = vmatprep.subr.mxu0 0.0
    %529 = vmatpush1.msra.mxu0 0.0
    %530 = vmatprep.subr.mxu0 0.0
    %531 = vmatpush1.msra.mxu0 0.0
    %532 = vmatprep.subr.mxu0 0.0
    %533 = vmatpush1.msra.mxu0 0.0
    %534 = vmatprep.subr.mxu0 0.0
    %535 = vmatpush1.msra.mxu0 0.0
    %536 = vmatprep.subr.mxu0 0.0
    %537 = vmatpush1.msra.mxu0 0.0
    %538 = vmatprep.subr.mxu0 0.0
    %539 = vmatpush1.msra.mxu0 0.0
    %540 = vmatprep.subr.mxu0 0.0
    %541 = vmatpush1.msra.mxu0 0.0
    %542 = vmatprep.subr.mxu0 0.0
    %543 = vmatpush1.msra.mxu0 0.0
    %544 = vmatprep.subr.mxu0 0.0
    %545 = vmatpush1.msra.mxu0 0.0
    %546 = vmatprep.subr.mxu0 0.0
    %547 = vmatpush1.msra.mxu0 0.0
    %548 = vmatprep.subr.mxu0 0.0
    %549 = vmatpush1.msra.mxu0 0.0
    %550 = vmatprep.subr.mxu0 0.0
    %551 = vmatpush1.msra.mxu0 0.0
    %552 = vmatprep.subr.mxu0 0.0
    %553 = vmatpush1.msra.mxu0 0.0
    %554 = vmatprep.subr.mxu0 0.0
    %555 = vmatpush1.msra.mxu0 0.0
    %556 = vmatprep.subr.mxu0 0.0
    %557 = vmatpush1.msra.mxu0 0.0
    %558 = vmatprep.subr.mxu0 0.0
    %559 = vmatpush1.msra.mxu0 0.0
    %560 = vmatprep.subr.mxu0 0.0
    %561 = vmatpush1.msra.mxu0 0.0
    %562 = vmatprep.subr.mxu0 0.0
    %563 = vmatpush1.msra.mxu0 0.0
    %564 = vmatprep.subr.mxu0 0.0
    %565 = vmatpush1.msra.mxu0 0.0
    %566 = vmatprep.subr.mxu0 0.0
    %567 = vmatpush1.msra.mxu0 0.0
    %568 = vmatprep.subr.mxu0 0.0
    %569 = vmatpush1.msra.mxu0 0.0
    %570 = vmatprep.subr.mxu0 0.0
    %571 = vmatpush1.msra.mxu0 0.0
    %572 = vmatprep.subr.mxu0 0.0
    %573 = vmatpush1.msra.mxu0 0.0
    %574 = vmatprep.subr.mxu0 0.0
    %575 = vmatpush1.msra.mxu0 0.0
    %576 = vmatprep.subr.mxu0 0.0
    %577 = vmatpush1.msra.mxu0 0.0
    %578 = vmatprep.subr.mxu0 0.0
    %579 = vmatpush1.msra.mxu0 0.0
    %580 = vmatprep.subr.mxu0 0.0
    %581 = vmatpush1.msra.mxu0 0.0
    %582 = vmatprep.subr.mxu0 0.0
    %583 = vmatpush1.msra.mxu0 0.0
    %584 = vmatprep.subr.mxu0 0.0
    %585 = vmatpush1.msra.mxu0 0.0
    %586 = vmatprep.subr.mxu0 0.0
    %587 = vmatpush1.msra.mxu0 0.0
    %588 = vmatprep.mubr.f32.mxu0 0.0
    %589 = vmatmul.mubr.f32.gmra.mrb[0].mxu0 %v522
    %v590 = vpop.f32.mrb[0].mxu0
    %v591 = vadd.f32 0.0, %v590
    %v592 = vpop.f32.mrb[0].mxu0
    %593 = vdwg.mxu0
    %v595 = vsel %vm346, %v520, 0
    %597 = vmatprep.subr.mxu0 0.0
    %598 = vmatpush1.msra.mxu0 %v337
    %599 = vmatprep.subr.mxu0 0.0
    %600 = vmatpush1.msra.mxu0 0.0
    %601 = vmatprep.subr.mxu0 0.0
    %602 = vmatpush1.msra.mxu0 0.0
    %603 = vmatprep.subr.mxu0 0.0
    %604 = vmatpush1.msra.mxu0 0.0
    %605 = vmatprep.subr.mxu0 0.0
    %606 = vmatpush1.msra.mxu0 0.0
    %607 = vmatprep.subr.mxu0 0.0
    %608 = vmatpush1.msra.mxu0 0.0
    %609 = vmatprep.subr.mxu0 0.0
    %610 = vmatpush1.msra.mxu0 0.0
    %611 = vmatprep.subr.mxu0 0.0
    %612 = vmatpush1.msra.mxu0 0.0
    %613 = vmatprep.subr.mxu0 0.0
    %614 = vmatpush1.msra.mxu0 0.0
    %615 = vmatprep.subr.mxu0 0.0
    %616 = vmatpush1.msra.mxu0 0.0
    %617 = vmatprep.subr.mxu0 0.0
    %618 = vmatpush1.msra.mxu0 0.0
    %619 = vmatprep.subr.mxu0 0.0
    %620 = vmatpush1.msra.mxu0 0.0
    %621 = vmatprep.subr.mxu0 0.0
    %622 = vmatpush1.msra.mxu0 0.0
    %623 = vmatprep.subr.mxu0 0.0
    %624 = vmatpush1.msra.mxu0 0.0
    %625 = vmatprep.subr.mxu0 0.0
    %626 = vmatpush1.msra.mxu0 0.0
    %627 = vmatprep.subr.mxu0 0.0
    %628 = vmatpush1.msra.mxu0 0.0
    %629 = vmatprep.subr.mxu0 0.0
    %630 = vmatpush1.msra.mxu0 0.0
    %631 = vmatprep.subr.mxu0 0.0
    %632 = vmatpush1.msra.mxu0 0.0
    %633 = vmatprep.subr.mxu0 0.0
    %634 = vmatpush1.msra.mxu0 0.0
    %635 = vmatprep.subr.mxu0 0.0
    %636 = vmatpush1.msra.mxu0 0.0
    %637 = vmatprep.subr.mxu0 0.0
    %638 = vmatpush1.msra.mxu0 0.0
    %639 = vmatprep.subr.mxu0 0.0
    %640 = vmatpush1.msra.mxu0 0.0
    %641 = vmatprep.subr.mxu0 0.0
    %642 = vmatpush1.msra.mxu0 0.0
    %643 = vmatprep.subr.mxu0 0.0
    %644 = vmatpush1.msra.mxu0 0.0
    %645 = vmatprep.subr.mxu0 0.0
    %646 = vmatpush1.msra.mxu0 0.0
    %647 = vmatprep.subr.mxu0 0.0
    %648 = vmatpush1.msra.mxu0 0.0
    %649 = vmatprep.subr.mxu0 0.0
    %650 = vmatpush1.msra.mxu0 0.0
    %651 = vmatprep.subr.mxu0 0.0
    %652 = vmatpush1.msra.mxu0 0.0
    %653 = vmatprep.subr.mxu0 0.0
    %654 = vmatpush1.msra.mxu0 0.0
    %655 = vmatprep.subr.mxu0 0.0
    %656 = vmatpush1.msra.mxu0 0.0
    %657 = vmatprep.subr.mxu0 0.0
    %658 = vmatpush1.msra.mxu0 0.0
    %659 = vmatprep.subr.mxu0 0.0
    %660 = vmatpush1.msra.mxu0 0.0
    %661 = vmatprep.mubr.f32.mxu0 0.0
    %662 = vmatmul.mubr.f32.gmra.mrb[0].mxu0 %v595
    %v663 = vpop.f32.mrb[0].mxu0
    %v664 = vadd.f32 0.0, %v663
    %v665 = vpop.f32.mrb[0].mxu0
    %666 = vdwg.mxu0
    %v667 = vld [vmem:[#allocation10] sm:$0xff]
    %668 = vrot.lane.b32.xlu0 %v180, 120
    %v669 = vpop.permute.xlu0 %668
    %670 = vrot.lane.b32.xlu0 %v253, 120
    %v671 = vpop.permute.xlu0 %670
    %v672 = vsel %vm346, %v669, 0
    %v674 = vsel %vm346, %v671, 0
    %676 = vmatprep.subr.mxu0 0.0
    %677 = vmatpush1.xpose.msra.mxu0 %v674
    %678 = vmatprep.subr.mxu0 0.0
    %679 = vmatpush1.xpose.msra.mxu0 0.0
    %680 = vmatprep.subr.mxu0 0.0
    %681 = vmatpush1.xpose.msra.mxu0 0.0
    %682 = vmatprep.subr.mxu0 0.0
    %683 = vmatpush1.xpose.msra.mxu0 0.0
    %684 = vmatprep.subr.mxu0 0.0
    %685 = vmatpush1.xpose.msra.mxu0 0.0
    %686 = vmatprep.subr.mxu0 0.0
    %687 = vmatpush1.xpose.msra.mxu0 0.0
    %688 = vmatprep.subr.mxu0 0.0
    %689 = vmatpush1.xpose.msra.mxu0 0.0
    %690 = vmatprep.subr.mxu0 0.0
    %691 = vmatpush1.xpose.msra.mxu0 0.0
    %692 = vmatprep.subr.mxu0 0.0
    %693 = vmatpush1.xpose.msra.mxu0 0.0
    %694 = vmatprep.subr.mxu0 0.0
    %695 = vmatpush1.xpose.msra.mxu0 0.0
    %696 = vmatprep.subr.mxu0 0.0
    %697 = vmatpush1.xpose.msra.mxu0 0.0
    %698 = vmatprep.subr.mxu0 0.0
    %699 = vmatpush1.xpose.msra.mxu0 0.0
    %700 = vmatprep.subr.mxu0 0.0
    %701 = vmatpush1.xpose.msra.mxu0 0.0
    %702 = vmatprep.subr.mxu0 0.0
    %703 = vmatpush1.xpose.msra.mxu0 0.0
    %704 = vmatprep.subr.mxu0 0.0
    %705 = vmatpush1.xpose.msra.mxu0 0.0
    %706 = vmatprep.subr.mxu0 0.0
    %707 = vmatpush1.xpose.msra.mxu0 0.0
    %708 = vmatprep.subr.mxu0 0.0
    %709 = vmatpush1.xpose.msra.mxu0 0.0
    %710 = vmatprep.subr.mxu0 0.0
    %711 = vmatpush1.xpose.msra.mxu0 0.0
    %712 = vmatprep.subr.mxu0 0.0
    %713 = vmatpush1.xpose.msra.mxu0 0.0
    %714 = vmatprep.subr.mxu0 0.0
    %715 = vmatpush1.xpose.msra.mxu0 0.0
    %716 = vmatprep.subr.mxu0 0.0
    %717 = vmatpush1.xpose.msra.mxu0 0.0
    %718 = vmatprep.subr.mxu0 0.0
    %719 = vmatpush1.xpose.msra.mxu0 0.0
    %720 = vmatprep.subr.mxu0 0.0
    %721 = vmatpush1.xpose.msra.mxu0 0.0
    %722 = vmatprep.subr.mxu0 0.0
    %723 = vmatpush1.xpose.msra.mxu0 0.0
    %724 = vmatprep.subr.mxu0 0.0
    %725 = vmatpush1.xpose.msra.mxu0 0.0
    %726 = vmatprep.subr.mxu0 0.0
    %727 = vmatpush1.xpose.msra.mxu0 0.0
    %728 = vmatprep.subr.mxu0 0.0
    %729 = vmatpush1.xpose.msra.mxu0 0.0
    %730 = vmatprep.subr.mxu0 0.0
    %731 = vmatpush1.xpose.msra.mxu0 0.0
    %732 = vmatprep.subr.mxu0 0.0
    %733 = vmatpush1.xpose.msra.mxu0 0.0
    %734 = vmatprep.subr.mxu0 0.0
    %735 = vmatpush1.xpose.msra.mxu0 0.0
    %736 = vmatprep.subr.mxu0 0.0
    %737 = vmatpush1.xpose.msra.mxu0 0.0
    %738 = vmatprep.subr.mxu0 0.0
    %739 = vmatpush1.xpose.msra.mxu0 0.0
    %740 = vmatprep.mubr.f32.mxu0 0.0
    %741 = vmatmul.mubr.f32.gmra.mrb[0].mxu0 %v672
    %v742 = vpop.f32.mrb[0].mxu0
    %v743 = vadd.f32 %v345, %v742
    %v744 = vpop.f32.mrb[0].mxu0
    %745 = vdwg.mxu0
    %746 = vrot.lane.b32.xlu0 %v181, 120
    %v747 = vpop.permute.xlu0 %746
    %748 = vrot.lane.b32.xlu0 %v258, 120
    %v749 = vpop.permute.xlu0 %748
    %v750 = vsel %vm346, %v747, 0
    %v752 = vsel %vm346, %v749, 0
    %754 = vmatprep.subr.mxu0 0.0
    %755 = vmatpush1.xpose.msra.mxu0 %v752
    %756 = vmatprep.subr.mxu0 0.0
    %757 = vmatpush1.xpose.msra.mxu0 0.0
    %758 = vmatprep.subr.mxu0 0.0
    %759 = vmatpush1.xpose.msra.mxu0 0.0
    %760 = vmatprep.subr.mxu0 0.0
    %761 = vmatpush1.xpose.msra.mxu0 0.0
    %762 = vmatprep.subr.mxu0 0.0
    %763 = vmatpush1.xpose.msra.mxu0 0.0
    %764 = vmatprep.subr.mxu0 0.0
    %765 = vmatpush1.xpose.msra.mxu0 0.0
    %766 = vmatprep.subr.mxu0 0.0
    %767 = vmatpush1.xpose.msra.mxu0 0.0
    %768 = vmatprep.subr.mxu0 0.0
    %769 = vmatpush1.xpose.msra.mxu0 0.0
    %770 = vmatprep.subr.mxu0 0.0
    %771 = vmatpush1.xpose.msra.mxu0 0.0
    %772 = vmatprep.subr.mxu0 0.0
    %773 = vmatpush1.xpose.msra.mxu0 0.0
    %774 = vmatprep.subr.mxu0 0.0
    %775 = vmatpush1.xpose.msra.mxu0 0.0
    %776 = vmatprep.subr.mxu0 0.0
    %777 = vmatpush1.xpose.msra.mxu0 0.0
    %778 = vmatprep.subr.mxu0 0.0
    %779 = vmatpush1.xpose.msra.mxu0 0.0
    %780 = vmatprep.subr.mxu0 0.0
    %781 = vmatpush1.xpose.msra.mxu0 0.0
    %782 = vmatprep.subr.mxu0 0.0
    %783 = vmatpush1.xpose.msra.mxu0 0.0
    %784 = vmatprep.subr.mxu0 0.0
    %785 = vmatpush1.xpose.msra.mxu0 0.0
    %786 = vmatprep.subr.mxu0 0.0
    %787 = vmatpush1.xpose.msra.mxu0 0.0
    %788 = vmatprep.subr.mxu0 0.0
    %789 = vmatpush1.xpose.msra.mxu0 0.0
    %790 = vmatprep.subr.mxu0 0.0
    %791 = vmatpush1.xpose.msra.mxu0 0.0
    %792 = vmatprep.subr.mxu0 0.0
    %793 = vmatpush1.xpose.msra.mxu0 0.0
    %794 = vmatprep.subr.mxu0 0.0
    %795 = vmatpush1.xpose.msra.mxu0 0.0
    %796 = vmatprep.subr.mxu0 0.0
    %797 = vmatpush1.xpose.msra.mxu0 0.0
    %798 = vmatprep.subr.mxu0 0.0
    %799 = vmatpush1.xpose.msra.mxu0 0.0
    %800 = vmatprep.subr.mxu0 0.0
    %801 = vmatpush1.xpose.msra.mxu0 0.0
    %802 = vmatprep.subr.mxu0 0.0
    %803 = vmatpush1.xpose.msra.mxu0 0.0
    %804 = vmatprep.subr.mxu0 0.0
    %805 = vmatpush1.xpose.msra.mxu0 0.0
    %806 = vmatprep.subr.mxu0 0.0
    %807 = vmatpush1.xpose.msra.mxu0 0.0
    %808 = vmatprep.subr.mxu0 0.0
    %809 = vmatpush1.xpose.msra.mxu0 0.0
    %810 = vmatprep.subr.mxu0 0.0
    %811 = vmatpush1.xpose.msra.mxu0 0.0
    %812 = vmatprep.subr.mxu0 0.0
    %813 = vmatpush1.xpose.msra.mxu0 0.0
    %814 = vmatprep.subr.mxu0 0.0
    %815 = vmatpush1.xpose.msra.mxu0 0.0
    %816 = vmatprep.subr.mxu0 0.0
    %817 = vmatpush1.xpose.msra.mxu0 0.0
    %818 = vmatprep.mubr.f32.mxu0 0.0
    %819 = vmatmul.mubr.f32.gmra.mrb[0].mxu0 %v750
    %v820 = vpop.f32.mrb[0].mxu0
    %v821 = vadd.f32 %v345, %v820
    %v822 = vpop.f32.mrb[0].mxu0
    %823 = vdwg.mxu0
    %v824 = vsel %vm346, %v743, -inf
    %825 = vmax.xlane.f32.xlu0 %v824
    %v826 = vpop.xlane.xlu0 %825
    %v827 = vsel %vm346, %v821, -inf
    %828 = vmax.xlane.f32.xlu0 %v827
    %v829 = vpop.xlane.xlu0 %828
    %v830 = vsub.f32 %v743, %v826
    %v831 = vsub.f32 %v821, %v829
    %v832 = vmul.f32 %v830, 1.442695
    %v833 = vpow.pop %v832
    %v834 = vmul.f32 %v831, 1.442695
    %v835 = vpow.pop %v834
    %v836 = vsel %vm346, %v833, 0.0
    %837 = vadd.xlane.f32.xlu0 %v836
    %v838 = vpop.xlane.xlu0 %837
    %v839 = vsel %vm346, %v835, 0.0
    %840 = vadd.xlane.f32.xlu0 %v839
    %v841 = vpop.xlane.xlu0 %840
    %v842 = vrcp.pop %v838
    %v843 = vmul.f32 %v833, %v842
    %v844 = vrcp.pop %v841
    %v845 = vmul.f32 %v835, %v844
    %847 = vrot.lane.b32.xlu0 %v332, 120
    %v848 = vpop.permute.xlu0 %847
    %v851 = vsel %vm346, %v843, 0
    %853 = vmatprep.subr.mxu0 0.0
    %854 = vmatpush1.msra.mxu0 %v848
    %855 = vmatprep.subr.mxu0 0.0
    %856 = vmatpush1.msra.mxu0 0.0
    %857 = vmatprep.subr.mxu0 0.0
    %858 = vmatpush1.msra.mxu0 0.0
    %859 = vmatprep.subr.mxu0 0.0
    %860 = vmatpush1.msra.mxu0 0.0
    %861 = vmatprep.subr.mxu0 0.0
    %862 = vmatpush1.msra.mxu0 0.0
    %863 = vmatprep.subr.mxu0 0.0
    %864 = vmatpush1.msra.mxu0 0.0
    %865 = vmatprep.subr.mxu0 0.0
    %866 = vmatpush1.msra.mxu0 0.0
    %867 = vmatprep.subr.mxu0 0.0
    %868 = vmatpush1.msra.mxu0 0.0
    %869 = vmatprep.subr.mxu0 0.0
    %870 = vmatpush1.msra.mxu0 0.0
    %871 = vmatprep.subr.mxu0 0.0
    %872 = vmatpush1.msra.mxu0 0.0
    %873 = vmatprep.subr.mxu0 0.0
    %874 = vmatpush1.msra.mxu0 0.0
    %875 = vmatprep.subr.mxu0 0.0
    %876 = vmatpush1.msra.mxu0 0.0
    %877 = vmatprep.subr.mxu0 0.0
    %878 = vmatpush1.msra.mxu0 0.0
    %879 = vmatprep.subr.mxu0 0.0
    %880 = vmatpush1.msra.mxu0 0.0
    %881 = vmatprep.subr.mxu0 0.0
    %882 = vmatpush1.msra.mxu0 0.0
    %883 = vmatprep.subr.mxu0 0.0
    %884 = vmatpush1.msra.mxu0 0.0
    %885 = vmatprep.subr.mxu0 0.0
    %886 = vmatpush1.msra.mxu0 0.0
    %887 = vmatprep.subr.mxu0 0.0
    %888 = vmatpush1.msra.mxu0 0.0
    %889 = vmatprep.subr.mxu0 0.0
    %890 = vmatpush1.msra.mxu0 0.0
    %891 = vmatprep.subr.mxu0 0.0
    %892 = vmatpush1.msra.mxu0 0.0
    %893 = vmatprep.subr.mxu0 0.0
    %894 = vmatpush1.msra.mxu0 0.0
    %895 = vmatprep.subr.mxu0 0.0
    %896 = vmatpush1.msra.mxu0 0.0
    %897 = vmatprep.subr.mxu0 0.0
    %898 = vmatpush1.msra.mxu0 0.0
    %899 = vmatprep.subr.mxu0 0.0
    %900 = vmatpush1.msra.mxu0 0.0
    %901 = vmatprep.subr.mxu0 0.0
    %902 = vmatpush1.msra.mxu0 0.0
    %903 = vmatprep.subr.mxu0 0.0
    %904 = vmatpush1.msra.mxu0 0.0
    %905 = vmatprep.subr.mxu0 0.0
    %906 = vmatpush1.msra.mxu0 0.0
    %907 = vmatprep.subr.mxu0 0.0
    %908 = vmatpush1.msra.mxu0 0.0
    %909 = vmatprep.subr.mxu0 0.0
    %910 = vmatpush1.msra.mxu0 0.0
    %911 = vmatprep.subr.mxu0 0.0
    %912 = vmatpush1.msra.mxu0 0.0
    %913 = vmatprep.subr.mxu0 0.0
    %914 = vmatpush1.msra.mxu0 0.0
    %915 = vmatprep.subr.mxu0 0.0
    %916 = vmatpush1.msra.mxu0 0.0
    %917 = vmatprep.mubr.f32.mxu0 0.0
    %918 = vmatmul.mubr.f32.gmra.mrb[0].mxu0 %v851
    %v919 = vpop.f32.mrb[0].mxu0
    %v920 = vadd.f32 0.0, %v919
    %v921 = vpop.f32.mrb[0].mxu0
    %922 = vdwg.mxu0
    %924 = vrot.lane.b32.xlu0 %v337, 120
    %v925 = vpop.permute.xlu0 %924
    %v928 = vsel %vm346, %v845, 0
    %930 = vmatprep.subr.mxu0 0.0
    %931 = vmatpush1.msra.mxu0 %v925
    %932 = vmatprep.subr.mxu0 0.0
    %933 = vmatpush1.msra.mxu0 0.0
    %934 = vmatprep.subr.mxu0 0.0
    %935 = vmatpush1.msra.mxu0 0.0
    %936 = vmatprep.subr.mxu0 0.0
    %937 = vmatpush1.msra.mxu0 0.0
    %938 = vmatprep.subr.mxu0 0.0
    %939 = vmatpush1.msra.mxu0 0.0
    %940 = vmatprep.subr.mxu0 0.0
    %941 = vmatpush1.msra.mxu0 0.0
    %942 = vmatprep.subr.mxu0 0.0
    %943 = vmatpush1.msra.mxu0 0.0
    %944 = vmatprep.subr.mxu0 0.0
    %945 = vmatpush1.msra.mxu0 0.0
    %946 = vmatprep.subr.mxu0 0.0
    %947 = vmatpush1.msra.mxu0 0.0
    %948 = vmatprep.subr.mxu0 0.0
    %949 = vmatpush1.msra.mxu0 0.0
    %950 = vmatprep.subr.mxu0 0.0
    %951 = vmatpush1.msra.mxu0 0.0
    %952 = vmatprep.subr.mxu0 0.0
    %953 = vmatpush1.msra.mxu0 0.0
    %954 = vmatprep.subr.mxu0 0.0
    %955 = vmatpush1.msra.mxu0 0.0
    %956 = vmatprep.subr.mxu0 0.0
    %957 = vmatpush1.msra.mxu0 0.0
    %958 = vmatprep.subr.mxu0 0.0
    %959 = vmatpush1.msra.mxu0 0.0
    %960 = vmatprep.subr.mxu0 0.0
    %961 = vmatpush1.msra.mxu0 0.0
    %962 = vmatprep.subr.mxu0 0.0
    %963 = vmatpush1.msra.mxu0 0.0
    %964 = vmatprep.subr.mxu0 0.0
    %965 = vmatpush1.msra.mxu0 0.0
    %966 = vmatprep.subr.mxu0 0.0
    %967 = vmatpush1.msra.mxu0 0.0
    %968 = vmatprep.subr.mxu0 0.0
    %969 = vmatpush1.msra.mxu0 0.0
    %970 = vmatprep.subr.mxu0 0.0
    %971 = vmatpush1.msra.mxu0 0.0
    %972 = vmatprep.subr.mxu0 0.0
    %973 = vmatpush1.msra.mxu0 0.0
    %974 = vmatprep.subr.mxu0 0.0
    %975 = vmatpush1.msra.mxu0 0.0
    %976 = vmatprep.subr.mxu0 0.0
    %977 = vmatpush1.msra.mxu0 0.0
    %978 = vmatprep.subr.mxu0 0.0
    %979 = vmatpush1.msra.mxu0 0.0
    %980 = vmatprep.subr.mxu0 0.0
    %981 = vmatpush1.msra.mxu0 0.0
    %982 = vmatprep.subr.mxu0 0.0
    %983 = vmatpush1.msra.mxu0 0.0
    %984 = vmatprep.subr.mxu0 0.0
    %985 = vmatpush1.msra.mxu0 0.0
    %986 = vmatprep.subr.mxu0 0.0
    %987 = vmatpush1.msra.mxu0 0.0
    %988 = vmatprep.subr.mxu0 0.0
    %989 = vmatpush1.msra.mxu0 0.0
    %990 = vmatprep.subr.mxu0 0.0
    %991 = vmatpush1.msra.mxu0 0.0
    %992 = vmatprep.subr.mxu0 0.0
    %993 = vmatpush1.msra.mxu0 0.0
    %994 = vmatprep.mubr.f32.mxu0 0.0
    %995 = vmatmul.mubr.f32.gmra.mrb[0].mxu0 %v928
    %v996 = vpop.f32.mrb[0].mxu0
    %v997 = vadd.f32 0.0, %v996
    %v998 = vpop.f32.mrb[0].mxu0
    %999 = vdwg.mxu0
    %v1000 = vld [vmem:[#allocation10 + $0x8] sm:$0xff]
    %v1002 = vsel %vm346, %v920, 0
    %v1005 = vsel %vm346, %v997, 0
    %1007 = vmatprep.subr.mxu0 0.0
    %1008 = vmatpush1.msra.mxu0 %v1000
    %1009 = vmatprep.subr.mxu0 0.0
    %1010 = vmatpush1.msra.mxu0 0.0
    %1011 = vmatprep.subr.mxu0 0.0
    %1012 = vmatpush1.msra.mxu0 0.0
    %1013 = vmatprep.subr.mxu0 0.0
    %1014 = vmatpush1.msra.mxu0 0.0
    %1015 = vmatprep.subr.mxu0 0.0
    %1016 = vmatpush1.msra.mxu0 0.0
    %1017 = vmatprep.subr.mxu0 0.0
    %1018 = vmatpush1.msra.mxu0 0.0
    %1019 = vmatprep.subr.mxu0 0.0
    %1020 = vmatpush1.msra.mxu0 0.0
    %1021 = vmatprep.subr.mxu0 0.0
    %1022 = vmatpush1.msra.mxu0 0.0
    %1023 = vmatprep.subr.mxu0 0.0
    %1024 = vmatpush1.msra.mxu0 0.0
    %1025 = vmatprep.subr.mxu0 0.0
    %1026 = vmatpush1.msra.mxu0 0.0
    %1027 = vmatprep.subr.mxu0 0.0
    %1028 = vmatpush1.msra.mxu0 0.0
    %1029 = vmatprep.subr.mxu0 0.0
    %1030 = vmatpush1.msra.mxu0 0.0
    %1031 = vmatprep.subr.mxu0 0.0
    %1032 = vmatpush1.msra.mxu0 0.0
    %1033 = vmatprep.subr.mxu0 0.0
    %1034 = vmatpush1.msra.mxu0 0.0
    %1035 = vmatprep.subr.mxu0 0.0
    %1036 = vmatpush1.msra.mxu0 0.0
    %1037 = vmatprep.subr.mxu0 0.0
    %1038 = vmatpush1.msra.mxu0 0.0
    %1039 = vmatprep.subr.mxu0 0.0
    %1040 = vmatpush1.msra.mxu0 0.0
    %1041 = vmatprep.subr.mxu0 0.0
    %1042 = vmatpush1.msra.mxu0 0.0
    %1043 = vmatprep.subr.mxu0 0.0
    %1044 = vmatpush1.msra.mxu0 0.0
    %1045 = vmatprep.subr.mxu0 0.0
    %1046 = vmatpush1.msra.mxu0 0.0
    %1047 = vmatprep.subr.mxu0 0.0
    %1048 = vmatpush1.msra.mxu0 0.0
    %1049 = vmatprep.subr.mxu0 0.0
    %1050 = vmatpush1.msra.mxu0 0.0
    %1051 = vmatprep.subr.mxu0 0.0
    %1052 = vmatpush1.msra.mxu0 0.0
    %1053 = vmatprep.subr.mxu0 0.0
    %1054 = vmatpush1.msra.mxu0 0.0
    %1055 = vmatprep.subr.mxu0 0.0
    %1056 = vmatpush1.msra.mxu0 0.0
    %1057 = vmatprep.subr.mxu0 0.0
    %1058 = vmatpush1.msra.mxu0 0.0
    %1059 = vmatprep.subr.mxu0 0.0
    %1060 = vmatpush1.msra.mxu0 0.0
    %1061 = vmatprep.subr.mxu0 0.0
    %1062 = vmatpush1.msra.mxu0 0.0
    %1063 = vmatprep.subr.mxu0 0.0
    %1064 = vmatpush1.msra.mxu0 0.0
    %1065 = vmatprep.subr.mxu0 0.0
    %1066 = vmatpush1.msra.mxu0 0.0
    %1067 = vmatprep.subr.mxu0 0.0
    %1068 = vmatpush1.msra.mxu0 0.0
    %1069 = vmatprep.subr.mxu0 0.0
    %1070 = vmatpush1.msra.mxu0 0.0
    %1071 = vmatprep.mubr.f32.mxu0 0.0
    %1072 = vmatmul.mubr.f32.gmra.mrb[0].mxu0 %v1002
    %v1073 = vpop.f32.mrb[0].mxu0
    %v1074 = vadd.f32 0.0, %v1073
    %v1075 = vpop.f32.mrb[0].mxu0
    %1076 = vmatprep.mubr.f32.mxu0 0.0
    %1077 = vmatmul.mubr.f32.gmra.mrb[0].mxu0 %v1005
    %v1078 = vpop.f32.mrb[0].mxu0
    %v1079 = vadd.f32 0.0, %v1078
    %v1080 = vpop.f32.mrb[0].mxu0
    %1081 = vdwg.mxu0
    %v1083 = vsel %vm346, %v591, 0
    %v1086 = vsel %vm346, %v664, 0
    %1088 = vmatprep.subr.mxu0 0.0
    %1089 = vmatpush1.msra.mxu0 %v667
    %1090 = vmatprep.subr.mxu0 0.0
    %1091 = vmatpush1.msra.mxu0 0.0
    %1092 = vmatprep.subr.mxu0 0.0
    %1093 = vmatpush1.msra.mxu0 0.0
    %1094 = vmatprep.subr.mxu0 0.0
    %1095 = vmatpush1.msra.mxu0 0.0
    %1096 = vmatprep.subr.mxu0 0.0
    %1097 = vmatpush1.msra.mxu0 0.0
    %1098 = vmatprep.subr.mxu0 0.0
    %1099 = vmatpush1.msra.mxu0 0.0
    %1100 = vmatprep.subr.mxu0 0.0
    %1101 = vmatpush1.msra.mxu0 0.0
    %1102 = vmatprep.subr.mxu0 0.0
    %1103 = vmatpush1.msra.mxu0 0.0
    %1104 = vmatprep.subr.mxu0 0.0
    %1105 = vmatpush1.msra.mxu0 0.0
    %1106 = vmatprep.subr.mxu0 0.0
    %1107 = vmatpush1.msra.mxu0 0.0
    %1108 = vmatprep.subr.mxu0 0.0
    %1109 = vmatpush1.msra.mxu0 0.0
    %1110 = vmatprep.subr.mxu0 0.0
    %1111 = vmatpush1.msra.mxu0 0.0
    %1112 = vmatprep.subr.mxu0 0.0
    %1113 = vmatpush1.msra.mxu0 0.0
    %1114 = vmatprep.subr.mxu0 0.0
    %1115 = vmatpush1.msra.mxu0 0.0
    %1116 = vmatprep.subr.mxu0 0.0
    %1117 = vmatpush1.msra.mxu0 0.0
    %1118 = vmatprep.subr.mxu0 0.0
    %1119 = vmatpush1.msra.mxu0 0.0
    %1120 = vmatprep.subr.mxu0 0.0
    %1121 = vmatpush1.msra.mxu0 0.0
    %1122 = vmatprep.subr.mxu0 0.0
    %1123 = vmatpush1.msra.mxu0 0.0
    %1124 = vmatprep.subr.mxu0 0.0
    %1125 = vmatpush1.msra.mxu0 0.0
    %1126 = vmatprep.subr.mxu0 0.0
    %1127 = vmatpush1.msra.mxu0 0.0
    %1128 = vmatprep.subr.mxu0 0.0
    %1129 = vmatpush1.msra.mxu0 0.0
    %1130 = vmatprep.subr.mxu0 0.0
    %1131 = vmatpush1.msra.mxu0 0.0
    %1132 = vmatprep.subr.mxu0 0.0
    %1133 = vmatpush1.msra.mxu0 0.0
    %1134 = vmatprep.subr.mxu0 0.0
    %1135 = vmatpush1.msra.mxu0 0.0
    %1136 = vmatprep.subr.mxu0 0.0
    %1137 = vmatpush1.msra.mxu0 0.0
    %1138 = vmatprep.subr.mxu0 0.0
    %1139 = vmatpush1.msra.mxu0 0.0
    %1140 = vmatprep.subr.mxu0 0.0
    %1141 = vmatpush1.msra.mxu0 0.0
    %1142 = vmatprep.subr.mxu0 0.0
    %1143 = vmatpush1.msra.mxu0 0.0
    %1144 = vmatprep.subr.mxu0 0.0
    %1145 = vmatpush1.msra.mxu0 0.0
    %1146 = vmatprep.subr.mxu0 0.0
    %1147 = vmatpush1.msra.mxu0 0.0
    %1148 = vmatprep.subr.mxu0 0.0
    %1149 = vmatpush1.msra.mxu0 0.0
    %1150 = vmatprep.subr.mxu0 0.0
    %1151 = vmatpush1.msra.mxu0 0.0
    %1152 = vmatprep.mubr.f32.mxu0 0.0
    %1153 = vmatmul.mubr.f32.gmra.mrb[0].mxu0 %v1083
    %v1154 = vpop.f32.mrb[0].mxu0
    %v1155 = vadd.f32 %v1074, %v1154
    %v1156 = vpop.f32.mrb[0].mxu0
    %1157 = vmatprep.mubr.f32.mxu0 0.0
    %1158 = vmatmul.mubr.f32.gmra.mrb[0].mxu0 %v1086
    %v1159 = vpop.f32.mrb[0].mxu0
    %v1160 = vadd.f32 %v1079, %v1159
    %v1161 = vpop.f32.mrb[0].mxu0
    %1162 = vdwg.mxu0
    %1163 = vrot.lane.b32.xlu0 %v180, 112
    %v1164 = vpop.permute.xlu0 %1163
    %1165 = vrot.lane.b32.xlu0 %v253, 112
    %v1166 = vpop.permute.xlu0 %1165
    %v1167 = vsel %vm346, %v1164, 0
    %v1169 = vsel %vm346, %v1166, 0
    %1171 = vmatprep.subr.mxu0 0.0
    %1172 = vmatpush1.xpose.msra.mxu0 %v1169
    %1173 = vmatprep.subr.mxu0 0.0
    %1174 = vmatpush1.xpose.msra.mxu0 0.0
    %1175 = vmatprep.subr.mxu0 0.0
    %1176 = vmatpush1.xpose.msra.mxu0 0.0
    %1177 = vmatprep.subr.mxu0 0.0
    %1178 = vmatpush1.xpose.msra.mxu0 0.0
    %1179 = vmatprep.subr.mxu0 0.0
    %1180 = vmatpush1.xpose.msra.mxu0 0.0
    %1181 = vmatprep.subr.mxu0 0.0
    %1182 = vmatpush1.xpose.msra.mxu0 0.0
    %1183 = vmatprep.subr.mxu0 0.0
    %1184 = vmatpush1.xpose.msra.mxu0 0.0
    %1185 = vmatprep.subr.mxu0 0.0
    %1186 = vmatpush1.xpose.msra.mxu0 0.0
    %1187 = vmatprep.subr.mxu0 0.0
    %1188 = vmatpush1.xpose.msra.mxu0 0.0
    %1189 = vmatprep.subr.mxu0 0.0
    %1190 = vmatpush1.xpose.msra.mxu0 0.0
    %1191 = vmatprep.subr.mxu0 0.0
    %1192 = vmatpush1.xpose.msra.mxu0 0.0
    %1193 = vmatprep.subr.mxu0 0.0
    %1194 = vmatpush1.xpose.msra.mxu0 0.0
    %1195 = vmatprep.subr.mxu0 0.0
    %1196 = vmatpush1.xpose.msra.mxu0 0.0
    %1197 = vmatprep.subr.mxu0 0.0
    %1198 = vmatpush1.xpose.msra.mxu0 0.0
    %1199 = vmatprep.subr.mxu0 0.0
    %1200 = vmatpush1.xpose.msra.mxu0 0.0
    %1201 = vmatprep.subr.mxu0 0.0
    %1202 = vmatpush1.xpose.msra.mxu0 0.0
    %1203 = vmatprep.subr.mxu0 0.0
    %1204 = vmatpush1.xpose.msra.mxu0 0.0
    %1205 = vmatprep.subr.mxu0 0.0
    %1206 = vmatpush1.xpose.msra.mxu0 0.0
    %1207 = vmatprep.subr.mxu0 0.0
    %1208 = vmatpush1.xpose.msra.mxu0 0.0
    %1209 = vmatprep.subr.mxu0 0.0
    %1210 = vmatpush1.xpose.msra.mxu0 0.0
    %1211 = vmatprep.subr.mxu0 0.0
    %1212 = vmatpush1.xpose.msra.mxu0 0.0
    %1213 = vmatprep.subr.mxu0 0.0
    %1214 = vmatpush1.xpose.msra.mxu0 0.0
    %1215 = vmatprep.subr.mxu0 0.0
    %1216 = vmatpush1.xpose.msra.mxu0 0.0
    %1217 = vmatprep.subr.mxu0 0.0
    %1218 = vmatpush1.xpose.msra.mxu0 0.0
    %1219 = vmatprep.subr.mxu0 0.0
    %1220 = vmatpush1.xpose.msra.mxu0 0.0
    %1221 = vmatprep.subr.mxu0 0.0
    %1222 = vmatpush1.xpose.msra.mxu0 0.0
    %1223 = vmatprep.subr.mxu0 0.0
    %1224 = vmatpush1.xpose.msra.mxu0 0.0
    %1225 = vmatprep.subr.mxu0 0.0
    %1226 = vmatpush1.xpose.msra.mxu0 0.0
    %1227 = vmatprep.subr.mxu0 0.0
    %1228 = vmatpush1.xpose.msra.mxu0 0.0
    %1229 = vmatprep.subr.mxu0 0.0
    %1230 = vmatpush1.xpose.msra.mxu0 0.0
    %1231 = vmatprep.subr.mxu0 0.0
    %1232 = vmatpush1.xpose.msra.mxu0 0.0
    %1233 = vmatprep.subr.mxu0 0.0
    %1234 = vmatpush1.xpose.msra.mxu0 0.0
    %1235 = vmatprep.mubr.f32.mxu0 0.0
    %1236 = vmatmul.mubr.f32.gmra.mrb[0].mxu0 %v1167
    %v1237 = vpop.f32.mrb[0].mxu0
    %v1238 = vadd.f32 %v345, %v1237
    %v1239 = vpop.f32.mrb[0].mxu0
    %1240 = vdwg.mxu0
    %1241 = vrot.lane.b32.xlu0 %v181, 112
    %v1242 = vpop.permute.xlu0 %1241
    %1243 = vrot.lane.b32.xlu0 %v258, 112
    %v1244 = vpop.permute.xlu0 %1243
    %v1245 = vsel %vm346, %v1242, 0
    %v1247 = vsel %vm346, %v1244, 0
    %1249 = vmatprep.subr.mxu0 0.0
    %1250 = vmatpush1.xpose.msra.mxu0 %v1247
    %1251 = vmatprep.subr.mxu0 0.0
    %1252 = vmatpush1.xpose.msra.mxu0 0.0
    %1253 = vmatprep.subr.mxu0 0.0
    %1254 = vmatpush1.xpose.msra.mxu0 0.0
    %1255 = vmatprep.subr.mxu0 0.0
    %1256 = vmatpush1.xpose.msra.mxu0 0.0
    %1257 = vmatprep.subr.mxu0 0.0
    %1258 = vmatpush1.xpose.msra.mxu0 0.0
    %1259 = vmatprep.subr.mxu0 0.0
    %1260 = vmatpush1.xpose.msra.mxu0 0.0
    %1261 = vmatprep.subr.mxu0 0.0
    %1262 = vmatpush1.xpose.msra.mxu0 0.0
    %1263 = vmatprep.subr.mxu0 0.0
    %1264 = vmatpush1.xpose.msra.mxu0 0.0
    %1265 = vmatprep.subr.mxu0 0.0
    %1266 = vmatpush1.xpose.msra.mxu0 0.0
    %1267 = vmatprep.subr.mxu0 0.0
    %1268 = vmatpush1.xpose.msra.mxu0 0.0
    %1269 = vmatprep.subr.mxu0 0.0
    %1270 = vmatpush1.xpose.msra.mxu0 0.0
    %1271 = vmatprep.subr.mxu0 0.0
    %1272 = vmatpush1.xpose.msra.mxu0 0.0
    %1273 = vmatprep.subr.mxu0 0.0
    %1274 = vmatpush1.xpose.msra.mxu0 0.0
    %1275 = vmatprep.subr.mxu0 0.0
    %1276 = vmatpush1.xpose.msra.mxu0 0.0
    %1277 = vmatprep.subr.mxu0 0.0
    %1278 = vmatpush1.xpose.msra.mxu0 0.0
    %1279 = vmatprep.subr.mxu0 0.0
    %1280 = vmatpush1.xpose.msra.mxu0 0.0
    %1281 = vmatprep.subr.mxu0 0.0
    %1282 = vmatpush1.xpose.msra.mxu0 0.0
    %1283 = vmatprep.subr.mxu0 0.0
    %1284 = vmatpush1.xpose.msra.mxu0 0.0
    %1285 = vmatprep.subr.mxu0 0.0
    %1286 = vmatpush1.xpose.msra.mxu0 0.0
    %1287 = vmatprep.subr.mxu0 0.0
    %1288 = vmatpush1.xpose.msra.mxu0 0.0
    %1289 = vmatprep.subr.mxu0 0.0
    %1290 = vmatpush1.xpose.msra.mxu0 0.0
    %1291 = vmatprep.subr.mxu0 0.0
    %1292 = vmatpush1.xpose.msra.mxu0 0.0
    %1293 = vmatprep.subr.mxu0 0.0
    %1294 = vmatpush1.xpose.msra.mxu0 0.0
    %1295 = vmatprep.subr.mxu0 0.0
    %1296 = vmatpush1.xpose.msra.mxu0 0.0
    %1297 = vmatprep.subr.mxu0 0.0
    %1298 = vmatpush1.xpose.msra.mxu0 0.0
    %1299 = vmatprep.subr.mxu0 0.0
    %1300 = vmatpush1.xpose.msra.mxu0 0.0
    %1301 = vmatprep.subr.mxu0 0.0
    %1302 = vmatpush1.xpose.msra.mxu0 0.0
    %1303 = vmatprep.subr.mxu0 0.0
    %1304 = vmatpush1.xpose.msra.mxu0 0.0
    %1305 = vmatprep.subr.mxu0 0.0
    %1306 = vmatpush1.xpose.msra.mxu0 0.0
    %1307 = vmatprep.subr.mxu0 0.0
    %1308 = vmatpush1.xpose.msra.mxu0 0.0
    %1309 = vmatprep.subr.mxu0 0.0
    %1310 = vmatpush1.xpose.msra.mxu0 0.0
    %1311 = vmatprep.subr.mxu0 0.0
    %1312 = vmatpush1.xpose.msra.mxu0 0.0
    %1313 = vmatprep.mubr.f32.mxu0 0.0
    %1314 = vmatmul.mubr.f32.gmra.mrb[0].mxu0 %v1245
    %v1315 = vpop.f32.mrb[0].mxu0
    %v1316 = vadd.f32 %v345, %v1315
    %v1317 = vpop.f32.mrb[0].mxu0
    %1318 = vdwg.mxu0
    %v1319 = vsel %vm346, %v1238, -inf
    %1320 = vmax.xlane.f32.xlu0 %v1319
    %v1321 = vpop.xlane.xlu0 %1320
    %v1322 = vsel %vm346, %v1316, -inf
    %1323 = vmax.xlane.f32.xlu0 %v1322
    %v1324 = vpop.xlane.xlu0 %1323
    %v1325 = vsub.f32 %v1238, %v1321
    %v1326 = vsub.f32 %v1316, %v1324
    %v1327 = vmul.f32 %v1325, 1.442695
    %v1328 = vpow.pop %v1327
    %v1329 = vmul.f32 %v1326, 1.442695
    %v1330 = vpow.pop %v1329
    %v1331 = vsel %vm346, %v1328, 0.0
    %1332 = vadd.xlane.f32.xlu0 %v1331
    %v1333 = vpop.xlane.xlu0 %1332
    %v1334 = vsel %vm346, %v1330, 0.0
    %1335 = vadd.xlane.f32.xlu0 %v1334
    %v1336 = vpop.xlane.xlu0 %1335
    %v1337 = vrcp.pop %v1333
    %v1338 = vmul.f32 %v1328, %v1337
    %v1339 = vrcp.pop %v1336
    %v1340 = vmul.f32 %v1330, %v1339
    %1341 = vrot.lane.b32.xlu0 %v332, 112
    %v1342 = vpop.permute.xlu0 %1341
    %v1345 = vsel %vm346, %v1338, 0
    %1347 = vmatprep.subr.mxu0 0.0
    %1348 = vmatpush1.msra.mxu0 %v1342
    %1349 = vmatprep.subr.mxu0 0.0
    %1350 = vmatpush1.msra.mxu0 0.0
    %1351 = vmatprep.subr.mxu0 0.0
    %1352 = vmatpush1.msra.mxu0 0.0
    %1353 = vmatprep.subr.mxu0 0.0
    %1354 = vmatpush1.msra.mxu0 0.0
    %1355 = vmatprep.subr.mxu0 0.0
    %1356 = vmatpush1.msra.mxu0 0.0
    %1357 = vmatprep.subr.mxu0 0.0
    %1358 = vmatpush1.msra.mxu0 0.0
    %1359 = vmatprep.subr.mxu0 0.0
    %1360 = vmatpush1.msra.mxu0 0.0
    %1361 = vmatprep.subr.mxu0 0.0
    %1362 = vmatpush1.msra.mxu0 0.0
    %1363 = vmatprep.subr.mxu0 0.0
    %1364 = vmatpush1.msra.mxu0 0.0
    %1365 = vmatprep.subr.mxu0 0.0
    %1366 = vmatpush1.msra.mxu0 0.0
    %1367 = vmatprep.subr.mxu0 0.0
    %1368 = vmatpush1.msra.mxu0 0.0
    %1369 = vmatprep.subr.mxu0 0.0
    %1370 = vmatpush1.msra.mxu0 0.0
    %1371 = vmatprep.subr.mxu0 0.0
    %1372 = vmatpush1.msra.mxu0 0.0
    %1373 = vmatprep.subr.mxu0 0.0
    %1374 = vmatpush1.msra.mxu0 0.0
    %1375 = vmatprep.subr.mxu0 0.0
    %1376 = vmatpush1.msra.mxu0 0.0
    %1377 = vmatprep.subr.mxu0 0.0
    %1378 = vmatpush1.msra.mxu0 0.0
    %1379 = vmatprep.subr.mxu0 0.0
    %1380 = vmatpush1.msra.mxu0 0.0
    %1381 = vmatprep.subr.mxu0 0.0
    %1382 = vmatpush1.msra.mxu0 0.0
    %1383 = vmatprep.subr.mxu0 0.0
    %1384 = vmatpush1.msra.mxu0 0.0
    %1385 = vmatprep.subr.mxu0 0.0
    %1386 = vmatpush1.msra.mxu0 0.0
    %1387 = vmatprep.subr.mxu0 0.0
    %1388 = vmatpush1.msra.mxu0 0.0
    %1389 = vmatprep.subr.mxu0 0.0
    %1390 = vmatpush1.msra.mxu0 0.0
    %1391 = vmatprep.subr.mxu0 0.0
    %1392 = vmatpush1.msra.mxu0 0.0
    %1393 = vmatprep.subr.mxu0 0.0
    %1394 = vmatpush1.msra.mxu0 0.0
    %1395 = vmatprep.subr.mxu0 0.0
    %1396 = vmatpush1.msra.mxu0 0.0
    %1397 = vmatprep.subr.mxu0 0.0
    %1398 = vmatpush1.msra.mxu0 0.0
    %1399 = vmatprep.subr.mxu0 0.0
    %1400 = vmatpush1.msra.mxu0 0.0
    %1401 = vmatprep.subr.mxu0 0.0
    %1402 = vmatpush1.msra.mxu0 0.0
    %1403 = vmatprep.subr.mxu0 0.0
    %1404 = vmatpush1.msra.mxu0 0.0
    %1405 = vmatprep.subr.mxu0 0.0
    %1406 = vmatpush1.msra.mxu0 0.0
    %1407 = vmatprep.subr.mxu0 0.0
    %1408 = vmatpush1.msra.mxu0 0.0
    %1409 = vmatprep.subr.mxu0 0.0
    %1410 = vmatpush1.msra.mxu0 0.0
    %1411 = vmatprep.mubr.f32.mxu0 0.0
    %1412 = vmatmul.mubr.f32.gmra.mrb[0].mxu0 %v1345
    %v1413 = vpop.f32.mrb[0].mxu0
    %v1414 = vadd.f32 0.0, %v1413
    %v1415 = vpop.f32.mrb[0].mxu0
    %1416 = vdwg.mxu0
    %1417 = vrot.lane.b32.xlu0 %v337, 112
    %v1418 = vpop.permute.xlu0 %1417
    %v1421 = vsel %vm346, %v1340, 0
    %1423 = vmatprep.subr.mxu0 0.0
    %1424 = vmatpush1.msra.mxu0 %v1418
    %1425 = vmatprep.subr.mxu0 0.0
    %1426 = vmatpush1.msra.mxu0 0.0
    %1427 = vmatprep.subr.mxu0 0.0
    %1428 = vmatpush1.msra.mxu0 0.0
    %1429 = vmatprep.subr.mxu0 0.0
    %1430 = vmatpush1.msra.mxu0 0.0
    %1431 = vmatprep.subr.mxu0 0.0
    %1432 = vmatpush1.msra.mxu0 0.0
    %1433 = vmatprep.subr.mxu0 0.0
    %1434 = vmatpush1.msra.mxu0 0.0
    %1435 = vmatprep.subr.mxu0 0.0
    %1436 = vmatpush1.msra.mxu0 0.0
    %1437 = vmatprep.subr.mxu0 0.0
    %1438 = vmatpush1.msra.mxu0 0.0
    %1439 = vmatprep.subr.mxu0 0.0
    %1440 = vmatpush1.msra.mxu0 0.0
    %1441 = vmatprep.subr.mxu0 0.0
    %1442 = vmatpush1.msra.mxu0 0.0
    %1443 = vmatprep.subr.mxu0 0.0
    %1444 = vmatpush1.msra.mxu0 0.0
    %1445 = vmatprep.subr.mxu0 0.0
    %1446 = vmatpush1.msra.mxu0 0.0
    %1447 = vmatprep.subr.mxu0 0.0
    %1448 = vmatpush1.msra.mxu0 0.0
    %1449 = vmatprep.subr.mxu0 0.0
    %1450 = vmatpush1.msra.mxu0 0.0
    %1451 = vmatprep.subr.mxu0 0.0
    %1452 = vmatpush1.msra.mxu0 0.0
    %1453 = vmatprep.subr.mxu0 0.0
    %1454 = vmatpush1.msra.mxu0 0.0
    %1455 = vmatprep.subr.mxu0 0.0
    %1456 = vmatpush1.msra.mxu0 0.0
    %1457 = vmatprep.subr.mxu0 0.0
    %1458 = vmatpush1.msra.mxu0 0.0
    %1459 = vmatprep.subr.mxu0 0.0
    %1460 = vmatpush1.msra.mxu0 0.0
    %1461 = vmatprep.subr.mxu0 0.0
    %1462 = vmatpush1.msra.mxu0 0.0
    %1463 = vmatprep.subr.mxu0 0.0
    %1464 = vmatpush1.msra.mxu0 0.0
    %1465 = vmatprep.subr.mxu0 0.0
    %1466 = vmatpush1.msra.mxu0 0.0
    %1467 = vmatprep.subr.mxu0 0.0
    %1468 = vmatpush1.msra.mxu0 0.0
    %1469 = vmatprep.subr.mxu0 0.0
    %1470 = vmatpush1.msra.mxu0 0.0
    %1471 = vmatprep.subr.mxu0 0.0
    %1472 = vmatpush1.msra.mxu0 0.0
    %1473 = vmatprep.subr.mxu0 0.0
    %1474 = vmatpush1.msra.mxu0 0.0
    %1475 = vmatprep.subr.mxu0 0.0
    %1476 = vmatpush1.msra.mxu0 0.0
    %1477 = vmatprep.subr.mxu0 0.0
    %1478 = vmatpush1.msra.mxu0 0.0
    %1479 = vmatprep.subr.mxu0 0.0
    %1480 = vmatpush1.msra.mxu0 0.0
    %1481 = vmatprep.subr.mxu0 0.0
    %1482 = vmatpush1.msra.mxu0 0.0
    %1483 = vmatprep.subr.mxu0 0.0
    %1484 = vmatpush1.msra.mxu0 0.0
    %1485 = vmatprep.subr.mxu0 0.0
    %1486 = vmatpush1.msra.mxu0 0.0
    %1487 = vmatprep.mubr.f32.mxu0 0.0
    %1488 = vmatmul.mubr.f32.gmra.mrb[0].mxu0 %v1421
    %v1489 = vpop.f32.mrb[0].mxu0
    %v1490 = vadd.f32 0.0, %v1489
    %v1491 = vpop.f32.mrb[0].mxu0
    %1492 = vdwg.mxu0
    %v1493 = vld [vmem:[#allocation10 + $0x10] sm:$0xff]
    %v1495 = vsel %vm346, %v1414, 0
    %v1498 = vsel %vm346, %v1490, 0
    %1500 = vmatprep.subr.mxu0 0.0
    %1501 = vmatpush1.msra.mxu0 %v1493
    %1502 = vmatprep.subr.mxu0 0.0
    %1503 = vmatpush1.msra.mxu0 0.0
    %1504 = vmatprep.subr.mxu0 0.0
    %1505 = vmatpush1.msra.mxu0 0.0
    %1506 = vmatprep.subr.mxu0 0.0
    %1507 = vmatpush1.msra.mxu0 0.0
    %1508 = vmatprep.subr.mxu0 0.0
    %1509 = vmatpush1.msra.mxu0 0.0
    %1510 = vmatprep.subr.mxu0 0.0
    %1511 = vmatpush1.msra.mxu0 0.0
    %1512 = vmatprep.subr.mxu0 0.0
    %1513 = vmatpush1.msra.mxu0 0.0
    %1514 = vmatprep.subr.mxu0 0.0
    %1515 = vmatpush1.msra.mxu0 0.0
    %1516 = vmatprep.subr.mxu0 0.0
    %1517 = vmatpush1.msra.mxu0 0.0
    %1518 = vmatprep.subr.mxu0 0.0
    %1519 = vmatpush1.msra.mxu0 0.0
    %1520 = vmatprep.subr.mxu0 0.0
    %1521 = vmatpush1.msra.mxu0 0.0
    %1522 = vmatprep.subr.mxu0 0.0
    %1523 = vmatpush1.msra.mxu0 0.0
    %1524 = vmatprep.subr.mxu0 0.0
    %1525 = vmatpush1.msra.mxu0 0.0
    %1526 = vmatprep.subr.mxu0 0.0
    %1527 = vmatpush1.msra.mxu0 0.0
    %1528 = vmatprep.subr.mxu0 0.0
    %1529 = vmatpush1.msra.mxu0 0.0
    %1530 = vmatprep.subr.mxu0 0.0
    %1531 = vmatpush1.msra.mxu0 0.0
    %1532 = vmatprep.subr.mxu0 0.0
    %1533 = vmatpush1.msra.mxu0 0.0
    %1534 = vmatprep.subr.mxu0 0.0
    %1535 = vmatpush1.msra.mxu0 0.0
    %1536 = vmatprep.subr.mxu0 0.0
    %1537 = vmatpush1.msra.mxu0 0.0
    %1538 = vmatprep.subr.mxu0 0.0
    %1539 = vmatpush1.msra.mxu0 0.0
    %1540 = vmatprep.subr.mxu0 0.0
    %1541 = vmatpush1.msra.mxu0 0.0
    %1542 = vmatprep.subr.mxu0 0.0
    %1543 = vmatpush1.msra.mxu0 0.0
    %1544 = vmatprep.subr.mxu0 0.0
    %1545 = vmatpush1.msra.mxu0 0.0
    %1546 = vmatprep.subr.mxu0 0.0
    %1547 = vmatpush1.msra.mxu0 0.0
    %1548 = vmatprep.subr.mxu0 0.0
    %1549 = vmatpush1.msra.mxu0 0.0
    %1550 = vmatprep.subr.mxu0 0.0
    %1551 = vmatpush1.msra.mxu0 0.0
    %1552 = vmatprep.subr.mxu0 0.0
    %1553 = vmatpush1.msra.mxu0 0.0
    %1554 = vmatprep.subr.mxu0 0.0
    %1555 = vmatpush1.msra.mxu0 0.0
    %1556 = vmatprep.subr.mxu0 0.0
    %1557 = vmatpush1.msra.mxu0 0.0
    %1558 = vmatprep.subr.mxu0 0.0
    %1559 = vmatpush1.msra.mxu0 0.0
    %1560 = vmatprep.subr.mxu0 0.0
    %1561 = vmatpush1.msra.mxu0 0.0
    %1562 = vmatprep.subr.mxu0 0.0
    %1563 = vmatpush1.msra.mxu0 0.0
    %1564 = vmatprep.mubr.f32.mxu0 0.0
    %1565 = vmatmul.mubr.f32.gmra.mrb[0].mxu0 %v1495
    %v1566 = vpop.f32.mrb[0].mxu0
    %v1567 = vadd.f32 0.0, %v1566
    %v1568 = vpop.f32.mrb[0].mxu0
    %1569 = vmatprep.mubr.f32.mxu0 0.0
    %1570 = vmatmul.mubr.f32.gmra.mrb[0].mxu0 %v1498
    %v1571 = vpop.f32.mrb[0].mxu0
    %v1572 = vadd.f32 0.0, %v1571
    %v1573 = vpop.f32.mrb[0].mxu0
    %1574 = vdwg.mxu0
    %v1575 = vadd.f32 %v1155, %v1567
    %v1576 = vadd.f32 %v1160, %v1572
    %1577 = vrot.lane.b32.xlu0 %v180, 104
    %v1578 = vpop.permute.xlu0 %1577
    %1579 = vrot.lane.b32.xlu0 %v253, 104
    %v1580 = vpop.permute.xlu0 %1579
    %v1581 = vsel %vm346, %v1578, 0
    %v1583 = vsel %vm346, %v1580, 0
    %1585 = vmatprep.subr.mxu0 0.0
    %1586 = vmatpush1.xpose.msra.mxu0 %v1583
    %1587 = vmatprep.subr.mxu0 0.0
    %1588 = vmatpush1.xpose.msra.mxu0 0.0
    %1589 = vmatprep.subr.mxu0 0.0
    %1590 = vmatpush1.xpose.msra.mxu0 0.0
    %1591 = vmatprep.subr.mxu0 0.0
    %1592 = vmatpush1.xpose.msra.mxu0 0.0
    %1593 = vmatprep.subr.mxu0 0.0
    %1594 = vmatpush1.xpose.msra.mxu0 0.0
    %1595 = vmatprep.subr.mxu0 0.0
    %1596 = vmatpush1.xpose.msra.mxu0 0.0
    %1597 = vmatprep.subr.mxu0 0.0
    %1598 = vmatpush1.xpose.msra.mxu0 0.0
    %1599 = vmatprep.subr.mxu0 0.0
    %1600 = vmatpush1.xpose.msra.mxu0 0.0
    %1601 = vmatprep.subr.mxu0 0.0
    %1602 = vmatpush1.xpose.msra.mxu0 0.0
    %1603 = vmatprep.subr.mxu0 0.0
    %1604 = vmatpush1.xpose.msra.mxu0 0.0
    %1605 = vmatprep.subr.mxu0 0.0
    %1606 = vmatpush1.xpose.msra.mxu0 0.0
    %1607 = vmatprep.subr.mxu0 0.0
    %1608 = vmatpush1.xpose.msra.mxu0 0.0
    %1609 = vmatprep.subr.mxu0 0.0
    %1610 = vmatpush1.xpose.msra.mxu0 0.0
    %1611 = vmatprep.subr.mxu0 0.0
    %1612 = vmatpush1.xpose.msra.mxu0 0.0
    %1613 = vmatprep.subr.mxu0 0.0
    %1614 = vmatpush1.xpose.msra.mxu0 0.0
    %1615 = vmatprep.subr.mxu0 0.0
    %1616 = vmatpush1.xpose.msra.mxu0 0.0
    %1617 = vmatprep.subr.mxu0 0.0
    %1618 = vmatpush1.xpose.msra.mxu0 0.0
    %1619 = vmatprep.subr.mxu0 0.0
    %1620 = vmatpush1.xpose.msra.mxu0 0.0
    %1621 = vmatprep.subr.mxu0 0.0
    %1622 = vmatpush1.xpose.msra.mxu0 0.0
    %1623 = vmatprep.subr.mxu0 0.0
    %1624 = vmatpush1.xpose.msra.mxu0 0.0
    %1625 = vmatprep.subr.mxu0 0.0
    %1626 = vmatpush1.xpose.msra.mxu0 0.0
    %1627 = vmatprep.subr.mxu0 0.0
    %1628 = vmatpush1.xpose.msra.mxu0 0.0
    %1629 = vmatprep.subr.mxu0 0.0
    %1630 = vmatpush1.xpose.msra.mxu0 0.0
    %1631 = vmatprep.subr.mxu0 0.0
    %1632 = vmatpush1.xpose.msra.mxu0 0.0
    %1633 = vmatprep.subr.mxu0 0.0
    %1634 = vmatpush1.xpose.msra.mxu0 0.0
    %1635 = vmatprep.subr.mxu0 0.0
    %1636 = vmatpush1.xpose.msra.mxu0 0.0
    %1637 = vmatprep.subr.mxu0 0.0
    %1638 = vmatpush1.xpose.msra.mxu0 0.0
    %1639 = vmatprep.subr.mxu0 0.0
    %1640 = vmatpush1.xpose.msra.mxu0 0.0
    %1641 = vmatprep.subr.mxu0 0.0
    %1642 = vmatpush1.xpose.msra.mxu0 0.0
    %1643 = vmatprep.subr.mxu0 0.0
    %1644 = vmatpush1.xpose.msra.mxu0 0.0
    %1645 = vmatprep.subr.mxu0 0.0
    %1646 = vmatpush1.xpose.msra.mxu0 0.0
    %1647 = vmatprep.subr.mxu0 0.0
    %1648 = vmatpush1.xpose.msra.mxu0 0.0
    %1649 = vmatprep.mubr.f32.mxu0 0.0
    %1650 = vmatmul.mubr.f32.gmra.mrb[0].mxu0 %v1581
    %v1651 = vpop.f32.mrb[0].mxu0
    %v1652 = vadd.f32 %v345, %v1651
    %v1653 = vpop.f32.mrb[0].mxu0
    %1654 = vdwg.mxu0
    %1655 = vrot.lane.b32.xlu0 %v181, 104
    %v1656 = vpop.permute.xlu0 %1655
    %1657 = vrot.lane.b32.xlu0 %v258, 104
    %v1658 = vpop.permute.xlu0 %1657
    %v1659 = vsel %vm346, %v1656, 0
    %v1661 = vsel %vm346, %v1658, 0
    %1663 = vmatprep.subr.mxu0 0.0
    %1664 = vmatpush1.xpose.msra.mxu0 %v1661
    %1665 = vmatprep.subr.mxu0 0.0
    %1666 = vmatpush1.xpose.msra.mxu0 0.0
    %1667 = vmatprep.subr.mxu0 0.0
    %1668 = vmatpush1.xpose.msra.mxu0 0.0
    %1669 = vmatprep.subr.mxu0 0.0
    %1670 = vmatpush1.xpose.msra.mxu0 0.0
    %1671 = vmatprep.subr.mxu0 0.0
    %1672 = vmatpush1.xpose.msra.mxu0 0.0
    %1673 = vmatprep.subr.mxu0 0.0
    %1674 = vmatpush1.xpose.msra.mxu0 0.0
    %1675 = vmatprep.subr.mxu0 0.0
    %1676 = vmatpush1.xpose.msra.mxu0 0.0
    %1677 = vmatprep.subr.mxu0 0.0
    %1678 = vmatpush1.xpose.msra.mxu0 0.0
    %1679 = vmatprep.subr.mxu0 0.0
    %1680 = vmatpush1.xpose.msra.mxu0 0.0
    %1681 = vmatprep.subr.mxu0 0.0
    %1682 = vmatpush1.xpose.msra.mxu0 0.0
    %1683 = vmatprep.subr.mxu0 0.0
    %1684 = vmatpush1.xpose.msra.mxu0 0.0
    %1685 = vmatprep.subr.mxu0 0.0
    %1686 = vmatpush1.xpose.msra.mxu0 0.0
    %1687 = vmatprep.subr.mxu0 0.0
    %1688 = vmatpush1.xpose.msra.mxu0 0.0
    %1689 = vmatprep.subr.mxu0 0.0
    %1690 = vmatpush1.xpose.msra.mxu0 0.0
    %1691 = vmatprep.subr.mxu0 0.0
    %1692 = vmatpush1.xpose.msra.mxu0 0.0
    %1693 = vmatprep.subr.mxu0 0.0
    %1694 = vmatpush1.xpose.msra.mxu0 0.0
    %1695 = vmatprep.subr.mxu0 0.0
    %1696 = vmatpush1.xpose.msra.mxu0 0.0
    %1697 = vmatprep.subr.mxu0 0.0
    %1698 = vmatpush1.xpose.msra.mxu0 0.0
    %1699 = vmatprep.subr.mxu0 0.0
    %1700 = vmatpush1.xpose.msra.mxu0 0.0
    %1701 = vmatprep.subr.mxu0 0.0
    %1702 = vmatpush1.xpose.msra.mxu0 0.0
    %1703 = vmatprep.subr.mxu0 0.0
    %1704 = vmatpush1.xpose.msra.mxu0 0.0
    %1705 = vmatprep.subr.mxu0 0.0
    %1706 = vmatpush1.xpose.msra.mxu0 0.0
    %1707 = vmatprep.subr.mxu0 0.0
    %1708 = vmatpush1.xpose.msra.mxu0 0.0
    %1709 = vmatprep.subr.mxu0 0.0
    %1710 = vmatpush1.xpose.msra.mxu0 0.0
    %1711 = vmatprep.subr.mxu0 0.0
    %1712 = vmatpush1.xpose.msra.mxu0 0.0
    %1713 = vmatprep.subr.mxu0 0.0
    %1714 = vmatpush1.xpose.msra.mxu0 0.0
    %1715 = vmatprep.subr.mxu0 0.0
    %1716 = vmatpush1.xpose.msra.mxu0 0.0
    %1717 = vmatprep.subr.mxu0 0.0
    %1718 = vmatpush1.xpose.msra.mxu0 0.0
    %1719 = vmatprep.subr.mxu0 0.0
    %1720 = vmatpush1.xpose.msra.mxu0 0.0
    %1721 = vmatprep.subr.mxu0 0.0
    %1722 = vmatpush1.xpose.msra.mxu0 0.0
    %1723 = vmatprep.subr.mxu0 0.0
    %1724 = vmatpush1.xpose.msra.mxu0 0.0
    %1725 = vmatprep.subr.mxu0 0.0
    %1726 = vmatpush1.xpose.msra.mxu0 0.0
    %1727 = vmatprep.mubr.f32.mxu0 0.0
    %1728 = vmatmul.mubr.f32.gmra.mrb[0].mxu0 %v1659
    %v1729 = vpop.f32.mrb[0].mxu0
    %v1730 = vadd.f32 %v345, %v1729
    %v1731 = vpop.f32.mrb[0].mxu0
    %1732 = vdwg.mxu0
    %v1733 = vsel %vm346, %v1652, -inf
    %1734 = vmax.xlane.f32.xlu0 %v1733
    %v1735 = vpop.xlane.xlu0 %1734
    %v1736 = vsel %vm346, %v1730, -inf
    %1737 = vmax.xlane.f32.xlu0 %v1736
    %v1738 = vpop.xlane.xlu0 %1737
    %v1739 = vsub.f32 %v1652, %v1735
    %v1740 = vsub.f32 %v1730, %v1738
    %v1741 = vmul.f32 %v1739, 1.442695
    %v1742 = vpow.pop %v1741
    %v1743 = vmul.f32 %v1740, 1.442695
    %v1744 = vpow.pop %v1743
    %v1745 = vsel %vm346, %v1742, 0.0
    %1746 = vadd.xlane.f32.xlu0 %v1745
    %v1747 = vpop.xlane.xlu0 %1746
    %v1748 = vsel %vm346, %v1744, 0.0
    %1749 = vadd.xlane.f32.xlu0 %v1748
    %v1750 = vpop.xlane.xlu0 %1749
    %v1751 = vrcp.pop %v1747
    %v1752 = vmul.f32 %v1742, %v1751
    %v1753 = vrcp.pop %v1750
    %v1754 = vmul.f32 %v1744, %v1753
    %1755 = vrot.lane.b32.xlu0 %v332, 104
    %v1756 = vpop.permute.xlu0 %1755
    %v1759 = vsel %vm346, %v1752, 0
    %1761 = vmatprep.subr.mxu0 0.0
    %1762 = vmatpush1.msra.mxu0 %v1756
    %1763 = vmatprep.subr.mxu0 0.0
    %1764 = vmatpush1.msra.mxu0 0.0
    %1765 = vmatprep.subr.mxu0 0.0
    %1766 = vmatpush1.msra.mxu0 0.0
    %1767 = vmatprep.subr.mxu0 0.0
    %1768 = vmatpush1.msra.mxu0 0.0
    %1769 = vmatprep.subr.mxu0 0.0
    %1770 = vmatpush1.msra.mxu0 0.0
    %1771 = vmatprep.subr.mxu0 0.0
    %1772 = vmatpush1.msra.mxu0 0.0
    %1773 = vmatprep.subr.mxu0 0.0
    %1774 = vmatpush1.msra.mxu0 0.0
    %1775 = vmatprep.subr.mxu0 0.0
    %1776 = vmatpush1.msra.mxu0 0.0
    %1777 = vmatprep.subr.mxu0 0.0
    %1778 = vmatpush1.msra.mxu0 0.0
    %1779 = vmatprep.subr.mxu0 0.0
    %1780 = vmatpush1.msra.mxu0 0.0
    %1781 = vmatprep.subr.mxu0 0.0
    %1782 = vmatpush1.msra.mxu0 0.0
    %1783 = vmatprep.subr.mxu0 0.0
    %1784 = vmatpush1.msra.mxu0 0.0
    %1785 = vmatprep.subr.mxu0 0.0
    %1786 = vmatpush1.msra.mxu0 0.0
    %1787 = vmatprep.subr.mxu0 0.0
    %1788 = vmatpush1.msra.mxu0 0.0
    %1789 = vmatprep.subr.mxu0 0.0
    %1790 = vmatpush1.msra.mxu0 0.0
    %1791 = vmatprep.subr.mxu0 0.0
    %1792 = vmatpush1.msra.mxu0 0.0
    %1793 = vmatprep.subr.mxu0 0.0
    %1794 = vmatpush1.msra.mxu0 0.0
    %1795 = vmatprep.subr.mxu0 0.0
    %1796 = vmatpush1.msra.mxu0 0.0
    %1797 = vmatprep.subr.mxu0 0.0
    %1798 = vmatpush1.msra.mxu0 0.0
    %1799 = vmatprep.subr.mxu0 0.0
    %1800 = vmatpush1.msra.mxu0 0.0
    %1801 = vmatprep.subr.mxu0 0.0
    %1802 = vmatpush1.msra.mxu0 0.0
    %1803 = vmatprep.subr.mxu0 0.0
    %1804 = vmatpush1.msra.mxu0 0.0
    %1805 = vmatprep.subr.mxu0 0.0
    %1806 = vmatpush1.msra.mxu0 0.0
    %1807 = vmatprep.subr.mxu0 0.0
    %1808 = vmatpush1.msra.mxu0 0.0
    %1809 = vmatprep.subr.mxu0 0.0
    %1810 = vmatpush1.msra.mxu0 0.0
    %1811 = vmatprep.subr.mxu0 0.0
    %1812 = vmatpush1.msra.mxu0 0.0
    %1813 = vmatprep.subr.mxu0 0.0
    %1814 = vmatpush1.msra.mxu0 0.0
    %1815 = vmatprep.subr.mxu0 0.0
    %1816 = vmatpush1.msra.mxu0 0.0
    %1817 = vmatprep.subr.mxu0 0.0
    %1818 = vmatpush1.msra.mxu0 0.0
    %1819 = vmatprep.subr.mxu0 0.0
    %1820 = vmatpush1.msra.mxu0 0.0
    %1821 = vmatprep.subr.mxu0 0.0
    %1822 = vmatpush1.msra.mxu0 0.0
    %1823 = vmatprep.subr.mxu0 0.0
    %1824 = vmatpush1.msra.mxu0 0.0
    %1825 = vmatprep.mubr.f32.mxu0 0.0
    %1826 = vmatmul.mubr.f32.gmra.mrb[0].mxu0 %v1759
    %v1827 = vpop.f32.mrb[0].mxu0
    %v1828 = vadd.f32 0.0, %v1827
    %v1829 = vpop.f32.mrb[0].mxu0
    %1830 = vdwg.mxu0
    %1831 = vrot.lane.b32.xlu0 %v337, 104
    %v1832 = vpop.permute.xlu0 %1831
    %v1835 = vsel %vm346, %v1754, 0
    %1837 = vmatprep.subr.mxu0 0.0
    %1838 = vmatpush1.msra.mxu0 %v1832
    %1839 = vmatprep.subr.mxu0 0.0
    %1840 = vmatpush1.msra.mxu0 0.0
    %1841 = vmatprep.subr.mxu0 0.0
    %1842 = vmatpush1.msra.mxu0 0.0
    %1843 = vmatprep.subr.mxu0 0.0
    %1844 = vmatpush1.msra.mxu0 0.0
    %1845 = vmatprep.subr.mxu0 0.0
    %1846 = vmatpush1.msra.mxu0 0.0
    %1847 = vmatprep.subr.mxu0 0.0
    %1848 = vmatpush1.msra.mxu0 0.0
    %1849 = vmatprep.subr.mxu0 0.0
    %1850 = vmatpush1.msra.mxu0 0.0
    %1851 = vmatprep.subr.mxu0 0.0
    %1852 = vmatpush1.msra.mxu0 0.0
    %1853 = vmatprep.subr.mxu0 0.0
    %1854 = vmatpush1.msra.mxu0 0.0
    %1855 = vmatprep.subr.mxu0 0.0
    %1856 = vmatpush1.msra.mxu0 0.0
    %1857 = vmatprep.subr.mxu0 0.0
    %1858 = vmatpush1.msra.mxu0 0.0
    %1859 = vmatprep.subr.mxu0 0.0
    %1860 = vmatpush1.msra.mxu0 0.0
    %1861 = vmatprep.subr.mxu0 0.0
    %1862 = vmatpush1.msra.mxu0 0.0
    %1863 = vmatprep.subr.mxu0 0.0
    %1864 = vmatpush1.msra.mxu0 0.0
    %1865 = vmatprep.subr.mxu0 0.0
    %1866 = vmatpush1.msra.mxu0 0.0
    %1867 = vmatprep.subr.mxu0 0.0
    %1868 = vmatpush1.msra.mxu0 0.0
    %1869 = vmatprep.subr.mxu0 0.0
    %1870 = vmatpush1.msra.mxu0 0.0
    %1871 = vmatprep.subr.mxu0 0.0
    %1872 = vmatpush1.msra.mxu0 0.0
    %1873 = vmatprep.subr.mxu0 0.0
    %1874 = vmatpush1.msra.mxu0 0.0
    %1875 = vmatprep.subr.mxu0 0.0
    %1876 = vmatpush1.msra.mxu0 0.0
    %1877 = vmatprep.subr.mxu0 0.0
    %1878 = vmatpush1.msra.mxu0 0.0
    %1879 = vmatprep.subr.mxu0 0.0
    %1880 = vmatpush1.msra.mxu0 0.0
    %1881 = vmatprep.subr.mxu0 0.0
    %1882 = vmatpush1.msra.mxu0 0.0
    %1883 = vmatprep.subr.mxu0 0.0
    %1884 = vmatpush1.msra.mxu0 0.0
    %1885 = vmatprep.subr.mxu0 0.0
    %1886 = vmatpush1.msra.mxu0 0.0
    %1887 = vmatprep.subr.mxu0 0.0
    %1888 = vmatpush1.msra.mxu0 0.0
    %1889 = vmatprep.subr.mxu0 0.0
    %1890 = vmatpush1.msra.mxu0 0.0
    %1891 = vmatprep.subr.mxu0 0.0
    %1892 = vmatpush1.msra.mxu0 0.0
    %1893 = vmatprep.subr.mxu0 0.0
    %1894 = vmatpush1.msra.mxu0 0.0
    %1895 = vmatprep.subr.mxu0 0.0
    %1896 = vmatpush1.msra.mxu0 0.0
    %1897 = vmatprep.subr.mxu0 0.0
    %1898 = vmatpush1.msra.mxu0 0.0
    %1899 = vmatprep.subr.mxu0 0.0
    %1900 = vmatpush1.msra.mxu0 0.0
    %1901 = vmatprep.mubr.f32.mxu0 0.0
    %1902 = vmatmul.mubr.f32.gmra.mrb[0].mxu0 %v1835
    %v1903 = vpop.f32.mrb[0].mxu0
    %v1904 = vadd.f32 0.0, %v1903
    %v1905 = vpop.f32.mrb[0].mxu0
    %1906 = vdwg.mxu0
    %v1907 = vld [vmem:[#allocation10 + $0x18] sm:$0xff]
    %v1909 = vsel %vm346, %v1828, 0
    %v1912 = vsel %vm346, %v1904, 0
    %1914 = vmatprep.subr.mxu0 0.0
    %1915 = vmatpush1.msra.mxu0 %v1907
    %1916 = vmatprep.subr.mxu0 0.0
    %1917 = vmatpush1.msra.mxu0 0.0
    %1918 = vmatprep.subr.mxu0 0.0
    %1919 = vmatpush1.msra.mxu0 0.0
    %1920 = vmatprep.subr.mxu0 0.0
    %1921 = vmatpush1.msra.mxu0 0.0
    %1922 = vmatprep.subr.mxu0 0.0
    %1923 = vmatpush1.msra.mxu0 0.0
    %1924 = vmatprep.subr.mxu0 0.0
    %1925 = vmatpush1.msra.mxu0 0.0
    %1926 = vmatprep.subr.mxu0 0.0
    %1927 = vmatpush1.msra.mxu0 0.0
    %1928 = vmatprep.subr.mxu0 0.0
    %1929 = vmatpush1.msra.mxu0 0.0
    %1930 = vmatprep.subr.mxu0 0.0
    %1931 = vmatpush1.msra.mxu0 0.0
    %1932 = vmatprep.subr.mxu0 0.0
    %1933 = vmatpush1.msra.mxu0 0.0
    %1934 = vmatprep.subr.mxu0 0.0
    %1935 = vmatpush1.msra.mxu0 0.0
    %1936 = vmatprep.subr.mxu0 0.0
    %1937 = vmatpush1.msra.mxu0 0.0
    %1938 = vmatprep.subr.mxu0 0.0
    %1939 = vmatpush1.msra.mxu0 0.0
    %1940 = vmatprep.subr.mxu0 0.0
    %1941 = vmatpush1.msra.mxu0 0.0
    %1942 = vmatprep.subr.mxu0 0.0
    %1943 = vmatpush1.msra.mxu0 0.0
    %1944 = vmatprep.subr.mxu0 0.0
    %1945 = vmatpush1.msra.mxu0 0.0
    %1946 = vmatprep.subr.mxu0 0.0
    %1947 = vmatpush1.msra.mxu0 0.0
    %1948 = vmatprep.subr.mxu0 0.0
    %1949 = vmatpush1.msra.mxu0 0.0
    %1950 = vmatprep.subr.mxu0 0.0
    %1951 = vmatpush1.msra.mxu0 0.0
    %1952 = vmatprep.subr.mxu0 0.0
    %1953 = vmatpush1.msra.mxu0 0.0
    %1954 = vmatprep.subr.mxu0 0.0
    %1955 = vmatpush1.msra.mxu0 0.0
    %1956 = vmatprep.subr.mxu0 0.0
    %1957 = vmatpush1.msra.mxu0 0.0
    %1958 = vmatprep.subr.mxu0 0.0
    %1959 = vmatpush1.msra.mxu0 0.0
    %1960 = vmatprep.subr.mxu0 0.0
    %1961 = vmatpush1.msra.mxu0 0.0
    %1962 = vmatprep.subr.mxu0 0.0
    %1963 = vmatpush1.msra.mxu0 0.0
    %1964 = vmatprep.subr.mxu0 0.0
    %1965 = vmatpush1.msra.mxu0 0.0
    %1966 = vmatprep.subr.mxu0 0.0
    %1967 = vmatpush1.msra.mxu0 0.0
    %1968 = vmatprep.subr.mxu0 0.0
    %1969 = vmatpush1.msra.mxu0 0.0
    %1970 = vmatprep.subr.mxu0 0.0
    %1971 = vmatpush1.msra.mxu0 0.0
    %1972 = vmatprep.subr.mxu0 0.0
    %1973 = vmatpush1.msra.mxu0 0.0
    %1974 = vmatprep.subr.mxu0 0.0
    %1975 = vmatpush1.msra.mxu0 0.0
    %1976 = vmatprep.subr.mxu0 0.0
    %1977 = vmatpush1.msra.mxu0 0.0
    %1978 = vmatprep.mubr.f32.mxu0 0.0
    %1979 = vmatmul.mubr.f32.gmra.mrb[0].mxu0 %v1909
    %v1980 = vpop.f32.mrb[0].mxu0
    %v1981 = vadd.f32 0.0, %v1980
    %v1982 = vpop.f32.mrb[0].mxu0
    %1983 = vmatprep.mubr.f32.mxu0 0.0
    %1984 = vmatmul.mubr.f32.gmra.mrb[0].mxu0 %v1912
    %v1985 = vpop.f32.mrb[0].mxu0
    %v1986 = vadd.f32 0.0, %v1985
    %v1987 = vpop.f32.mrb[0].mxu0
    %1988 = vdwg.mxu0
    %v1989 = vadd.f32 %v1575, %v1981
    %v1990 = vadd.f32 %v1576, %v1986
    %v1991 = vld [vmem:[%s5] sm:$0x1]
    %v1993 = vlaneseq
    %v1994 = vshrl.u32 %v1993, 7
    %v1995 = vsub.s32 0, %v1994
    %v1996 = vrot.slane %v1991, %v1995
    %v1998 = vadd.f32 %v1989, %v1996
    %v1999 = vadd.f32 %v1990, %v1996
    %2000 = vst.msk [vmem:[#allocation11] sm:$0xff] %vm98, %v1998
    %2001 = vst.msk [vmem:[#allocation11 + $0x8] sm:$0xff] %vm98, %v1999
    // Predicated region
    $region46: #{tpu_custom_call.1} parent=1 // pred_check
      _
    $region47: #{tpu_custom_call.1} parent=1 // pred_check_branch
      %2003 = sbr.rel (0) target = $region49
    $region48: #{tpu_custom_call.1} parent=1 // pred_region
      %s2005 = ssub.s32 256, 256
      %2006 = vsyncadd [#allocation4], %s2005
      %s2007 = sshll.u32 [#allocation11], 4
      %s2008 = int_to_ptr.vmem [resolvable:$true] %s2007
      %2013 = dma.vmem_to_hbm [thread:$0]  %s2008, 256, %s6, [#allocation4], 128, 128, 8
    $region49: #{tpu_custom_call.1} parent=1 // pred_fallthru
      _
    // Predicated region
    $region50: #{tpu_custom_call.1} parent=1 // pred_check
      _
    $region51: #{tpu_custom_call.1} parent=1 // pred_check_branch
      %2015 = sbr.rel (0) target = $region53
    $region52: #{tpu_custom_call.1} parent=1 // pred_region
      %2016 = dma.done [#allocation4], 256
    $region53: #{tpu_custom_call.1} parent=1 // pred_fallthru
      _
    %2017 = vsyncpa [#allocation3], 1
    %2018 = vsyncpa [#allocation6], 1
    %2019 = vsyncpa [#allocation9], 1
    %2020 = vsyncpa [#allocation4], 1

</llo_original>
